<compile_context>
chip_gen: v5e
topology: v5e:2x2
jax: 0.10.0
libtpu: 0.0.40
codegen_flags: <defaults>
</compile_context>

<pallas_src>
import jax
import jax.numpy as jnp
from jax.experimental import pallas as pl
from jax.experimental.pallas import tpu as pltpu


# ---------------------------------------------------------------------------
# In-kernel helpers
# ---------------------------------------------------------------------------
def _layer_norm(x, gamma, beta, eps=1e-5):
    # x: (S, D); gamma/beta: (1, D) — computed in f32.
    mean = jnp.mean(x, axis=-1, keepdims=True)
    var = jnp.mean((x - mean) ** 2, axis=-1, keepdims=True)
    return (x - mean) * jax.lax.rsqrt(var + eps) * gamma + beta


# ---------------------------------------------------------------------------
# Kernel: one full (S, D) sequence per grid step
# ---------------------------------------------------------------------------
def _encoder_layer_kernel(x_ref,
                          wqkv_ref, bqkv_ref, wo_ref, bo_ref,
                          ln1_g_ref, ln1_b_ref,
                          w1_ref, b1_ref, w2_ref, b2_ref,
                          ln2_g_ref, ln2_b_ref,
                          out_ref):
    x = x_ref[...]                              # (S, D) f32 (batch dim squeezed away)
    S, D = x.shape
    NH = wqkv_ref.shape[0]
    dh = wqkv_ref.shape[2] // 3
    cdt = wqkv_ref.dtype                        # compute dtype for MXU operands (f32 or bf16)
    scale = 1.0 / float(dh) ** 0.5

    # ------------------ pre-norm multi-head self-attention ------------------
    xn = _layer_norm(x, ln1_g_ref[...], ln1_b_ref[...])                  # (S, D) f32
    xn_b = jnp.broadcast_to(xn.astype(cdt)[None], (NH, S, D))            # (NH, S, D)

    # Fused per-head QKV projection: one batched MXU matmul, f32 accumulate.
    qkv = jnp.einsum("hsd,hde->hse", xn_b, wqkv_ref[...],
                     preferred_element_type=jnp.float32) + bqkv_ref[...]  # (NH, S, 3*dh)

    q = (qkv[:, :, 0:dh] * scale).astype(cdt)    # scale once on (NH,S,dh), not on (NH,S,S)
    k = qkv[:, :, dh:2 * dh].astype(cdt)
    v = qkv[:, :, 2 * dh:3 * dh].astype(cdt)

    # Scores: contract last dims (no materialized transpose), batched over heads.
    scores = jnp.einsum("hqd,hkd->hqk", q, k,
                        preferred_element_type=jnp.float32)               # (NH, S, S) f32
    scores = scores - jnp.max(scores, axis=-1, keepdims=True)
    p = jnp.exp(scores)
    probs = p * pl.reciprocal(jnp.sum(p, axis=-1, keepdims=True), approx=True)

    ctx = jnp.einsum("hqk,hkd->hqd", probs.astype(cdt), v,
                     preferred_element_type=jnp.float32)                  # (NH, S, dh)

    # Output projection per head, then sum over heads == concat(ctx_h) @ Wo (no lane concat).
    attn_h = jnp.einsum("hqd,hdo->hqo", ctx.astype(cdt), wo_ref[...],
                        preferred_element_type=jnp.float32)               # (NH, S, D)
    attn = jnp.sum(attn_h, axis=0) + bo_ref[...]                          # (S, D) f32

    x1 = x + attn                                                         # residual #1 (f32)

    # ------------------------- pre-norm MLP block ---------------------------
    x1n = _layer_norm(x1, ln2_g_ref[...], ln2_b_ref[...])
    h = jnp.dot(x1n.astype(cdt), w1_ref[...],
                preferred_element_type=jnp.float32) + b1_ref[...]
    h = jax.nn.gelu(h, approximate=True)  # TODO(synk): TransformerMLP default activation assumed GELU(tanh)
    mlp = jnp.dot(h.astype(cdt), w2_ref[...],
                  preferred_element_type=jnp.float32) + b2_ref[...]

    out_ref[...] = (x1 + mlp).astype(out_ref.dtype)                       # residual #2


# ---------------------------------------------------------------------------
# pallas_call builder
# ---------------------------------------------------------------------------
def _make_weight_spec(shape, single_buffer):
    idx_map = lambda b: (0,) * len(shape)
    if single_buffer:
        # index_map is constant across the grid: double buffering buys nothing, halves weight VMEM.
        return pl.BlockSpec(shape, idx_map, pipeline_mode=pl.Buffered(1))
    return pl.BlockSpec(shape, idx_map)


def _build_encoder_call(B, S, D, H, num_heads, weights, single_buffer_weights):
    seq_spec = pl.BlockSpec((pl.Squeezed(), S, D), lambda b: (b, 0, 0))
    in_specs = [seq_spec] + [_make_weight_spec(w.shape, single_buffer_weights) for w in weights]
    out_spec = pl.BlockSpec((pl.Squeezed(), S, D), lambda b: (b, 0, 0))

    # Advisory cost estimate so XLA can schedule around this custom call.
    flops = B * (8 * S * D * D + 4 * S * S * D + 4 * S * D * H)
    transcendentals = B * (num_heads * S * S + S * H + 2 * S)
    bytes_accessed = (2 * B * S * D * 4
                      + sum(int(w.size) * int(w.dtype.itemsize) for w in weights))

    return pl.pallas_call(
        _encoder_layer_kernel,
        out_shape=jax.ShapeDtypeStruct((B, S, D), jnp.float32),
        grid_spec=pltpu.PrefetchScalarGridSpec(
            num_scalar_prefetch=0,
            grid=(B,),
            in_specs=in_specs,
            out_specs=out_spec,
        ),
        compiler_params=pltpu.CompilerParams(dimension_semantics=("parallel",)),
        cost_estimate=pl.CostEstimate(flops=flops,
                                      transcendentals=transcendentals,
                                      bytes_accessed=bytes_accessed),
    )


# ---------------------------------------------------------------------------
# Wrapper
# ---------------------------------------------------------------------------
def transformer_encoder_layer(x, params, num_heads, *, compute_dtype=jnp.float32):
    B, S, D = x.shape
    H = params["w1"].shape[1]
    dh = D // num_heads

    # --- head-batched, QKV-fused weight packing (free, done once outside the kernel) ---
    def heads_in(w):  # (D, D) -> (NH, D, dh); head h == columns [h*dh, (h+1)*dh)
        return w.reshape(D, num_heads, dh).transpose(1, 0, 2)

    wqkv_h = jnp.concatenate(
        [heads_in(params["wq"]), heads_in(params["wk"]), heads_in(params["wv"])],
        axis=-1).astype(compute_dtype)                                   # (NH, D, 3*dh)
    bqkv_h = jnp.concatenate(
        [params["bq"].reshape(num_heads, 1, dh),
         params["bk"].reshape(num_heads, 1, dh),
         params["bv"].reshape(num_heads, 1, dh)], axis=-1)               # (NH, 1, 3*dh) f32
    wo_h = params["wo"].reshape(num_heads, dh, D).astype(compute_dtype)  # (NH, dh, D)

    weights = [
        wqkv_h, bqkv_h, wo_h, params["bo"],
        params["ln1_g"], params["ln1_b"],
        params["w1"].astype(compute_dtype), params["b1"],
        params["w2"].astype(compute_dtype), params["b2"],
        params["ln2_g"], params["ln2_b"],
    ]

    def run(single_buffer_weights):
        fn = _build_encoder_call(B, S, D, H, num_heads, weights, single_buffer_weights)
        out = fn(x, *weights)
        return jax.block_until_ready(out)

    try:
        return run(single_buffer_weights=True)
    except Exception:
        # Fallback for JAX builds where pipeline_mode=pl.Buffered(1) is not accepted on TPU
        # pallas_call BlockSpecs; semantics are identical, only weight VMEM use differs.
        return run(single_buffer_weights=False)


# ---------------------------------------------------------------------------
# Pure-JAX reference (for a correctness sanity check)
# ---------------------------------------------------------------------------
def _reference(x, p, num_heads):
    def ln(v, g, b, eps=1e-5):
        m = jnp.mean(v, axis=-1, keepdims=True)
        var = jnp.mean((v - m) ** 2, axis=-1, keepdims=True)
        return (v - m) / jnp.sqrt(var + eps) * g + b

    B, S, D = x.shape
    dh = D // num_heads
    xn = ln(x, p["ln1_g"], p["ln1_b"])
    q = xn @ p["wq"] + p["bq"]
    k = xn @ p["wk"] + p["bk"]
    v = xn @ p["wv"] + p["bv"]
    q = q.reshape(B, S, num_heads, dh).transpose(0, 2, 1, 3)
    k = k.reshape(B, S, num_heads, dh).transpose(0, 2, 1, 3)
    v = v.reshape(B, S, num_heads, dh).transpose(0, 2, 1, 3)
    sc = jnp.einsum("bhqd,bhkd->bhqk", q, k) / jnp.sqrt(dh)
    pr = jax.nn.softmax(sc, axis=-1)
    ctx = jnp.einsum("bhqk,bhkd->bhqd", pr, v).transpose(0, 2, 1, 3).reshape(B, S, D)
    attn = ctx @ p["wo"] + p["bo"]
    x1 = x + attn
    x1n = ln(x1, p["ln2_g"], p["ln2_b"])
    h = jax.nn.gelu(x1n @ p["w1"] + p["b1"], approximate=True)
    return x1 + (h @ p["w2"] + p["b2"])


# ---------------------------------------------------------------------------
# Main
# ---------------------------------------------------------------------------
if __name__ == "__main__":
    B, S, D, NH, HID = 2, 8, 32, 4, 64   # batch, seq, model_dim, heads, mlp_hidden_dim

    key = jax.random.PRNGKey(0)
    keys = jax.random.split(key, 16)
    scale = 0.1

    params = {
        "wq": jax.random.normal(keys[0], (D, D), jnp.float32) * scale,
        "bq": jax.random.normal(keys[1], (1, D), jnp.float32) * scale,
        "wk": jax.random.normal(keys[2], (D, D), jnp.float32) * scale,
        "bk": jax.random.normal(keys[3], (1, D), jnp.float32) * scale,
        "wv": jax.random.normal(keys[4], (D, D), jnp.float32) * scale,
        "bv": jax.random.normal(keys[5], (1, D), jnp.float32) * scale,
        "wo": jax.random.normal(keys[6], (D, D), jnp.float32) * scale,
        "bo": jax.random.normal(keys[7], (1, D), jnp.float32) * scale,
        "ln1_g": jnp.ones((1, D), jnp.float32),
        "ln1_b": jnp.zeros((1, D), jnp.float32),
        "w1": jax.random.normal(keys[8], (D, HID), jnp.float32) * scale,
        "b1": jax.random.normal(keys[9], (1, HID), jnp.float32) * scale,
        "w2": jax.random.normal(keys[10], (HID, D), jnp.float32) * scale,
        "b2": jax.random.normal(keys[11], (1, D), jnp.float32) * scale,
        "ln2_g": jnp.ones((1, D), jnp.float32),
        "ln2_b": jnp.zeros((1, D), jnp.float32),
    }

    x = jax.random.normal(keys[12], (B, S, D), jnp.float32)

    ref = _reference(x, params, NH)

    # f32 compute path (default). The only deliberate deviation from exact math is the EUP
    # approximate reciprocal in the softmax denominator, hence the slightly relaxed tolerance.
    out = transformer_encoder_layer(x, params, NH)
    assert out.shape == (B, S, D)
    assert jnp.allclose(out, ref, atol=5e-3, rtol=5e-3), "f32 kernel mismatch vs reference"

    # bf16 MXU-operand path (recommended on v6e/v7x); residuals / LN / softmax stay in f32.
    out_bf16 = transformer_encoder_layer(x, params, NH, compute_dtype=jnp.bfloat16)
    assert jnp.allclose(out_bf16, ref, atol=5e-2, rtol=5e-2), "bf16 kernel mismatch vs reference"

    print("KERNEL_OK")
</pallas_src>

<mosaic_0001>
module attributes {stable_mosaic.version = 11 : i64} {
  func.func @_encoder_layer_kernel(%arg0: i32, %arg1: memref<1x8x32xf32, #tpu.memory_space<vmem>>, %arg2: memref<4x32x24xf32, #tpu.memory_space<vmem>>, %arg3: memref<4x1x24xf32, #tpu.memory_space<vmem>>, %arg4: memref<4x8x32xf32, #tpu.memory_space<vmem>>, %arg5: memref<1x32xf32, #tpu.memory_space<vmem>>, %arg6: memref<1x32xf32, #tpu.memory_space<vmem>>, %arg7: memref<1x32xf32, #tpu.memory_space<vmem>>, %arg8: memref<32x64xf32, #tpu.memory_space<vmem>>, %arg9: memref<1x64xf32, #tpu.memory_space<vmem>>, %arg10: memref<64x32xf32, #tpu.memory_space<vmem>>, %arg11: memref<1x32xf32, #tpu.memory_space<vmem>>, %arg12: memref<1x32xf32, #tpu.memory_space<vmem>>, %arg13: memref<1x32xf32, #tpu.memory_space<vmem>>, %arg14: memref<1x8x32xf32, #tpu.memory_space<vmem>>) attributes {dimension_semantics = [#tpu.dimension_semantics<parallel>], iteration_bounds = array<i64: 2>, scalar_prefetch = 0 : i64, scratch_operands = 0 : i64, tpu.core_type = #tpu.core_type<tc>, window_params = [{transform_indices = @transform_0, window_bounds = array<i64: 1, 8, 32>}, {pipeline_mode = #tpu.pipeline_mode<synchronous>, transform_indices = @transform_1, window_bounds = array<i64: 4, 32, 24>}, {pipeline_mode = #tpu.pipeline_mode<synchronous>, transform_indices = @transform_2, window_bounds = array<i64: 4, 1, 24>}, {pipeline_mode = #tpu.pipeline_mode<synchronous>, transform_indices = @transform_3, window_bounds = array<i64: 4, 8, 32>}, {pipeline_mode = #tpu.pipeline_mode<synchronous>, transform_indices = @transform_4, window_bounds = array<i64: 1, 32>}, {pipeline_mode = #tpu.pipeline_mode<synchronous>, transform_indices = @transform_5, window_bounds = array<i64: 1, 32>}, {pipeline_mode = #tpu.pipeline_mode<synchronous>, transform_indices = @transform_6, window_bounds = array<i64: 1, 32>}, {pipeline_mode = #tpu.pipeline_mode<synchronous>, transform_indices = @transform_7, window_bounds = array<i64: 32, 64>}, {pipeline_mode = #tpu.pipeline_mode<synchronous>, transform_indices = @transform_8, window_bounds = array<i64: 1, 64>}, {pipeline_mode = #tpu.pipeline_mode<synchronous>, transform_indices = @transform_9, window_bounds = array<i64: 64, 32>}, {pipeline_mode = #tpu.pipeline_mode<synchronous>, transform_indices = @transform_10, window_bounds = array<i64: 1, 32>}, {pipeline_mode = #tpu.pipeline_mode<synchronous>, transform_indices = @transform_11, window_bounds = array<i64: 1, 32>}, {pipeline_mode = #tpu.pipeline_mode<synchronous>, transform_indices = @transform_12, window_bounds = array<i64: 1, 32>}, {transform_indices = @transform_13, window_bounds = array<i64: 1, 8, 32>}]} {
    %c0 = arith.constant 0 : index
    %c0_0 = arith.constant 0 : index
    %c0_1 = arith.constant 0 : index
    %0 = vector.load %arg1[%c0, %c0_0, %c0_1] : memref<1x8x32xf32, #tpu.memory_space<vmem>>, vector<1x8x32xf32>
    %1 = vector.shape_cast %0 : vector<1x8x32xf32> to vector<8x32xf32>
    %c0_2 = arith.constant 0 : index
    %c0_3 = arith.constant 0 : index
    %2 = vector.load %arg6[%c0_2, %c0_3] : memref<1x32xf32, #tpu.memory_space<vmem>>, vector<1x32xf32>
    %c0_4 = arith.constant 0 : index
    %c0_5 = arith.constant 0 : index
    %3 = vector.load %arg7[%c0_4, %c0_5] : memref<1x32xf32, #tpu.memory_space<vmem>>, vector<1x32xf32>
    %cst = arith.constant dense<0.000000e+00> : vector<8xf32>
    %4 = vector.multi_reduction <add>, %1, %cst [1] : vector<8x32xf32> to vector<8xf32>
    %5 = vector.shape_cast %4 : vector<8xf32> to vector<8x1xf32>
    %cst_6 = arith.constant 3.200000e+01 : f32
    %6 = vector.broadcast %cst_6 : f32 to vector<8x1xf32>
    %7 = arith.divf %5, %6 : vector<8x1xf32>
    %8 = vector.broadcast %7 : vector<8x1xf32> to vector<8x32xf32>
    %9 = arith.subf %1, %8 : vector<8x32xf32>
    %10 = arith.mulf %9, %9 : vector<8x32xf32>
    %cst_7 = arith.constant dense<0.000000e+00> : vector<8xf32>
    %11 = vector.multi_reduction <add>, %10, %cst_7 [1] : vector<8x32xf32> to vector<8xf32>
    %12 = vector.shape_cast %11 : vector<8xf32> to vector<8x1xf32>
    %cst_8 = arith.constant 3.200000e+01 : f32
    %13 = vector.broadcast %cst_8 : f32 to vector<8x1xf32>
    %14 = arith.divf %12, %13 : vector<8x1xf32>
    %15 = vector.broadcast %7 : vector<8x1xf32> to vector<8x32xf32>
    %16 = arith.subf %1, %15 : vector<8x32xf32>
    %cst_9 = arith.constant 9.99999974E-6 : f32
    %17 = vector.broadcast %cst_9 : f32 to vector<8x1xf32>
    %18 = arith.addf %14, %17 : vector<8x1xf32>
    %19 = math.rsqrt %18 : vector<8x1xf32>
    %20 = vector.broadcast %19 : vector<8x1xf32> to vector<8x32xf32>
    %21 = arith.mulf %16, %20 : vector<8x32xf32>
    %22 = vector.broadcast %2 : vector<1x32xf32> to vector<8x32xf32>
    %23 = arith.mulf %21, %22 : vector<8x32xf32>
    %24 = vector.broadcast %3 : vector<1x32xf32> to vector<8x32xf32>
    %25 = arith.addf %23, %24 : vector<8x32xf32>
    %26 = vector.shape_cast %25 : vector<8x32xf32> to vector<1x8x32xf32>
    %27 = vector.shape_cast %26 : vector<1x8x32xf32> to vector<1x8x32xf32>
    %28 = vector.broadcast %27 : vector<1x8x32xf32> to vector<4x8x32xf32>
    %c0_10 = arith.constant 0 : index
    %c0_11 = arith.constant 0 : index
    %c0_12 = arith.constant 0 : index
    %29 = vector.load %arg2[%c0_10, %c0_11, %c0_12] : memref<4x32x24xf32, #tpu.memory_space<vmem>>, vector<4x32x24xf32>
    "tpu.trace_start"() <{level = 10 : i32, message = "hsd,hde->hse"}> : () -> ()
    %cst_13 = arith.constant dense<0.000000e+00> : vector<4x8x24xf32>
    %30 = tpu.matmul %28, %29, %cst_13 {dimension_numbers = #tpu.dot_dimension_numbers<[2], [1], [1], [2], [0, 0, 0, 1, 1, 2], [0], [0]>} : vector<4x8x32xf32>, vector<4x32x24xf32>, vector<4x8x24xf32> -> vector<4x8x24xf32>
    "tpu.trace_stop"() : () -> ()
    %c0_14 = arith.constant 0 : index
    %c0_15 = arith.constant 0 : index
    %c0_16 = arith.constant 0 : index
    %31 = vector.load %arg3[%c0_14, %c0_15, %c0_16] : memref<4x1x24xf32, #tpu.memory_space<vmem>>, vector<4x1x24xf32>
    %32 = vector.broadcast %31 : vector<4x1x24xf32> to vector<4x8x24xf32>
    %33 = arith.addf %30, %32 : vector<4x8x24xf32>
    %34 = vector.extract_strided_slice %33 {offsets = [0, 0, 0], sizes = [4, 8, 8], strides = [1, 1, 1]} : vector<4x8x24xf32> to vector<4x8x8xf32>
    %cst_17 = arith.constant 0.353553385 : f32
    %35 = vector.broadcast %cst_17 : f32 to vector<4x8x8xf32>
    %36 = arith.mulf %34, %35 : vector<4x8x8xf32>
    %37 = vector.extract_strided_slice %33 {offsets = [0, 0, 8], sizes = [4, 8, 8], strides = [1, 1, 1]} : vector<4x8x24xf32> to vector<4x8x8xf32>
    %38 = vector.extract_strided_slice %33 {offsets = [0, 0, 16], sizes = [4, 8, 8], strides = [1, 1, 1]} : vector<4x8x24xf32> to vector<4x8x8xf32>
    "tpu.trace_start"() <{level = 10 : i32, message = "hqd,hkd->hqk"}> : () -> ()
    %cst_18 = arith.constant dense<0.000000e+00> : vector<4x8x8xf32>
    %39 = tpu.matmul %36, %37, %cst_18 {dimension_numbers = #tpu.dot_dimension_numbers<[2], [2], [1], [1], [0, 0, 0, 1, 1, 1], [0], [0]>} : vector<4x8x8xf32>, vector<4x8x8xf32>, vector<4x8x8xf32> -> vector<4x8x8xf32>
    "tpu.trace_stop"() : () -> ()
    %cst_19 = arith.constant dense<0xFF800000> : vector<4x8xf32>
    %40 = vector.multi_reduction <maximumf>, %39, %cst_19 [2] : vector<4x8x8xf32> to vector<4x8xf32>
    %41 = vector.shape_cast %40 : vector<4x8xf32> to vector<4x8x1xf32>
    %42 = vector.broadcast %41 : vector<4x8x1xf32> to vector<4x8x8xf32>
    %43 = arith.subf %39, %42 : vector<4x8x8xf32>
    %44 = math.exp %43 : vector<4x8x8xf32>
    %cst_20 = arith.constant dense<0.000000e+00> : vector<4x8xf32>
    %45 = vector.multi_reduction <add>, %44, %cst_20 [2] : vector<4x8x8xf32> to vector<4x8xf32>
    %46 = vector.shape_cast %45 : vector<4x8xf32> to vector<4x8x1xf32>
    %47 = tpu.reciprocal %46 {approx = true} : vector<4x8x1xf32> -> vector<4x8x1xf32>
    %48 = vector.broadcast %47 : vector<4x8x1xf32> to vector<4x8x8xf32>
    %49 = arith.mulf %44, %48 : vector<4x8x8xf32>
    "tpu.trace_start"() <{level = 10 : i32, message = "hqk,hkd->hqd"}> : () -> ()
    %cst_21 = arith.constant dense<0.000000e+00> : vector<4x8x8xf32>
    %50 = tpu.matmul %49, %38, %cst_21 {dimension_numbers = #tpu.dot_dimension_numbers<[2], [1], [1], [2], [0, 0, 0, 1, 1, 2], [0], [0]>} : vector<4x8x8xf32>, vector<4x8x8xf32>, vector<4x8x8xf32> -> vector<4x8x8xf32>
    "tpu.trace_stop"() : () -> ()
    %c0_22 = arith.constant 0 : index
    %c0_23 = arith.constant 0 : index
    %c0_24 = arith.constant 0 : index
    %51 = vector.load %arg4[%c0_22, %c0_23, %c0_24] : memref<4x8x32xf32, #tpu.memory_space<vmem>>, vector<4x8x32xf32>
    "tpu.trace_start"() <{level = 10 : i32, message = "hqd,hdo->hqo"}> : () -> ()
    %cst_25 = arith.constant dense<0.000000e+00> : vector<4x8x32xf32>
    %52 = tpu.matmul %50, %51, %cst_25 {dimension_numbers = #tpu.dot_dimension_numbers<[2], [1], [1], [2], [0, 0, 0, 1, 1, 2], [0], [0]>} : vector<4x8x8xf32>, vector<4x8x32xf32>, vector<4x8x32xf32> -> vector<4x8x32xf32>
    "tpu.trace_stop"() : () -> ()
    %cst_26 = arith.constant dense<0.000000e+00> : vector<8x32xf32>
    %53 = vector.multi_reduction <add>, %52, %cst_26 [0] : vector<4x8x32xf32> to vector<8x32xf32>
    %c0_27 = arith.constant 0 : index
    %c0_28 = arith.constant 0 : index
    %54 = vector.load %arg5[%c0_27, %c0_28] : memref<1x32xf32, #tpu.memory_space<vmem>>, vector<1x32xf32>
    %55 = vector.broadcast %54 : vector<1x32xf32> to vector<8x32xf32>
    %56 = arith.addf %53, %55 : vector<8x32xf32>
    %57 = arith.addf %1, %56 : vector<8x32xf32>
    %c0_29 = arith.constant 0 : index
    %c0_30 = arith.constant 0 : index
    %58 = vector.load %arg12[%c0_29, %c0_30] : memref<1x32xf32, #tpu.memory_space<vmem>>, vector<1x32xf32>
    %c0_31 = arith.constant 0 : index
    %c0_32 = arith.constant 0 : index
    %59 = vector.load %arg13[%c0_31, %c0_32] : memref<1x32xf32, #tpu.memory_space<vmem>>, vector<1x32xf32>
    %cst_33 = arith.constant dense<0.000000e+00> : vector<8xf32>
    %60 = vector.multi_reduction <add>, %57, %cst_33 [1] : vector<8x32xf32> to vector<8xf32>
    %61 = vector.shape_cast %60 : vector<8xf32> to vector<8x1xf32>
    %cst_34 = arith.constant 3.200000e+01 : f32
    %62 = vector.broadcast %cst_34 : f32 to vector<8x1xf32>
    %63 = arith.divf %61, %62 : vector<8x1xf32>
    %64 = vector.broadcast %63 : vector<8x1xf32> to vector<8x32xf32>
    %65 = arith.subf %57, %64 : vector<8x32xf32>
    %66 = arith.mulf %65, %65 : vector<8x32xf32>
    %cst_35 = arith.constant dense<0.000000e+00> : vector<8xf32>
    %67 = vector.multi_reduction <add>, %66, %cst_35 [1] : vector<8x32xf32> to vector<8xf32>
    %68 = vector.shape_cast %67 : vector<8xf32> to vector<8x1xf32>
    %cst_36 = arith.constant 3.200000e+01 : f32
    %69 = vector.broadcast %cst_36 : f32 to vector<8x1xf32>
    %70 = arith.divf %68, %69 : vector<8x1xf32>
    %71 = vector.broadcast %63 : vector<8x1xf32> to vector<8x32xf32>
    %72 = arith.subf %57, %71 : vector<8x32xf32>
    %cst_37 = arith.constant 9.99999974E-6 : f32
    %73 = vector.broadcast %cst_37 : f32 to vector<8x1xf32>
    %74 = arith.addf %70, %73 : vector<8x1xf32>
    %75 = math.rsqrt %74 : vector<8x1xf32>
    %76 = vector.broadcast %75 : vector<8x1xf32> to vector<8x32xf32>
    %77 = arith.mulf %72, %76 : vector<8x32xf32>
    %78 = vector.broadcast %58 : vector<1x32xf32> to vector<8x32xf32>
    %79 = arith.mulf %77, %78 : vector<8x32xf32>
    %80 = vector.broadcast %59 : vector<1x32xf32> to vector<8x32xf32>
    %81 = arith.addf %79, %80 : vector<8x32xf32>
    %c0_38 = arith.constant 0 : index
    %c0_39 = arith.constant 0 : index
    %82 = vector.load %arg8[%c0_38, %c0_39] : memref<32x64xf32, #tpu.memory_space<vmem>>, vector<32x64xf32>
    %cst_40 = arith.constant dense<0.000000e+00> : vector<8x64xf32>
    %83 = tpu.matmul %81, %82, %cst_40 {dimension_numbers = #tpu.dot_dimension_numbers<[1], [0], [0], [1], [0, 0, 1, 1], [], []>} : vector<8x32xf32>, vector<32x64xf32>, vector<8x64xf32> -> vector<8x64xf32>
    %c0_41 = arith.constant 0 : index
    %c0_42 = arith.constant 0 : index
    %84 = vector.load %arg9[%c0_41, %c0_42] : memref<1x64xf32, #tpu.memory_space<vmem>>, vector<1x64xf32>
    %85 = vector.broadcast %84 : vector<1x64xf32> to vector<8x64xf32>
    %86 = arith.addf %83, %85 : vector<8x64xf32>
    %87 = arith.mulf %86, %86 : vector<8x64xf32>
    %88 = arith.mulf %86, %87 : vector<8x64xf32>
    %cst_43 = arith.constant 4.471500e-02 : f32
    %89 = vector.broadcast %cst_43 : f32 to vector<8x64xf32>
    %90 = arith.mulf %89, %88 : vector<8x64xf32>
    %91 = arith.addf %86, %90 : vector<8x64xf32>
    %cst_44 = arith.constant 0.797884583 : f32
    %92 = vector.broadcast %cst_44 : f32 to vector<8x64xf32>
    %93 = arith.mulf %92, %91 : vector<8x64xf32>
    %94 = math.tanh %93 : vector<8x64xf32>
    %cst_45 = arith.constant 1.000000e+00 : f32
    %95 = vector.broadcast %cst_45 : f32 to vector<8x64xf32>
    %96 = arith.addf %95, %94 : vector<8x64xf32>
    %cst_46 = arith.constant 5.000000e-01 : f32
    %97 = vector.broadcast %cst_46 : f32 to vector<8x64xf32>
    %98 = arith.mulf %97, %96 : vector<8x64xf32>
    %99 = arith.mulf %86, %98 : vector<8x64xf32>
    %c0_47 = arith.constant 0 : index
    %c0_48 = arith.constant 0 : index
    %100 = vector.load %arg10[%c0_47, %c0_48] : memref<64x32xf32, #tpu.memory_space<vmem>>, vector<64x32xf32>
    %cst_49 = arith.constant dense<0.000000e+00> : vector<8x32xf32>
    %101 = tpu.matmul %99, %100, %cst_49 {dimension_numbers = #tpu.dot_dimension_numbers<[1], [0], [0], [1], [0, 0, 1, 1], [], []>} : vector<8x64xf32>, vector<64x32xf32>, vector<8x32xf32> -> vector<8x32xf32>
    %c0_50 = arith.constant 0 : index
    %c0_51 = arith.constant 0 : index
    %102 = vector.load %arg11[%c0_50, %c0_51] : memref<1x32xf32, #tpu.memory_space<vmem>>, vector<1x32xf32>
    %103 = vector.broadcast %102 : vector<1x32xf32> to vector<8x32xf32>
    %104 = arith.addf %101, %103 : vector<8x32xf32>
    %105 = arith.addf %57, %104 : vector<8x32xf32>
    %c0_52 = arith.constant 0 : index
    %c0_53 = arith.constant 0 : index
    %c0_54 = arith.constant 0 : index
    %106 = vector.load %arg14[%c0_52, %c0_53, %c0_54] : memref<1x8x32xf32, #tpu.memory_space<vmem>>, vector<1x8x32xf32>
    %107 = vector.shape_cast %106 : vector<1x8x32xf32> to vector<8x32xf32>
    %108 = vector.shape_cast %105 : vector<8x32xf32> to vector<1x8x32xf32>
    tpu.vector_store %arg14[%c0_52, %c0_53, %c0_54], %108 {strides = array<i32>} : memref<1x8x32xf32, #tpu.memory_space<vmem>>, vector<1x8x32xf32>,
    return
  }
  func.func @transform_0(%arg0: i32) -> (i32, i32, i32) {
    %c0_i32 = arith.constant 0 : i32
    %c0_i32_0 = arith.constant 0 : i32
    %c0_i32_1 = arith.constant 0 : i32
    return %arg0, %c0_i32, %c0_i32_0 : i32, i32, i32
  }
  func.func @transform_1(%arg0: i32) -> (i32, i32, i32) {
    %c0_i32 = arith.constant 0 : i32
    %c0_i32_0 = arith.constant 0 : i32
    %c0_i32_1 = arith.constant 0 : i32
    %c0_i32_2 = arith.constant 0 : i32
    return %c0_i32, %c0_i32_0, %c0_i32_1 : i32, i32, i32
  }
  func.func @transform_2(%arg0: i32) -> (i32, i32, i32) {
    %c0_i32 = arith.constant 0 : i32
    %c0_i32_0 = arith.constant 0 : i32
    %c0_i32_1 = arith.constant 0 : i32
    %c0_i32_2 = arith.constant 0 : i32
    return %c0_i32, %c0_i32_0, %c0_i32_1 : i32, i32, i32
  }
  func.func @transform_3(%arg0: i32) -> (i32, i32, i32) {
    %c0_i32 = arith.constant 0 : i32
    %c0_i32_0 = arith.constant 0 : i32
    %c0_i32_1 = arith.constant 0 : i32
    %c0_i32_2 = arith.constant 0 : i32
    return %c0_i32, %c0_i32_0, %c0_i32_1 : i32, i32, i32
  }
  func.func @transform_4(%arg0: i32) -> (i32, i32) {
    %c0_i32 = arith.constant 0 : i32
    %c0_i32_0 = arith.constant 0 : i32
    %c0_i32_1 = arith.constant 0 : i32
    return %c0_i32, %c0_i32_0 : i32, i32
  }
  func.func @transform_5(%arg0: i32) -> (i32, i32) {
    %c0_i32 = arith.constant 0 : i32
    %c0_i32_0 = arith.constant 0 : i32
    %c0_i32_1 = arith.constant 0 : i32
    return %c0_i32, %c0_i32_0 : i32, i32
  }
  func.func @transform_6(%arg0: i32) -> (i32, i32) {
    %c0_i32 = arith.constant 0 : i32
    %c0_i32_0 = arith.constant 0 : i32
    %c0_i32_1 = arith.constant 0 : i32
    return %c0_i32, %c0_i32_0 : i32, i32
  }
  func.func @transform_7(%arg0: i32) -> (i32, i32) {
    %c0_i32 = arith.constant 0 : i32
    %c0_i32_0 = arith.constant 0 : i32
    %c0_i32_1 = arith.constant 0 : i32
    return %c0_i32, %c0_i32_0 : i32, i32
  }
  func.func @transform_8(%arg0: i32) -> (i32, i32) {
    %c0_i32 = arith.constant 0 : i32
    %c0_i32_0 = arith.constant 0 : i32
    %c0_i32_1 = arith.constant 0 : i32
    return %c0_i32, %c0_i32_0 : i32, i32
  }
  func.func @transform_9(%arg0: i32) -> (i32, i32) {
    %c0_i32 = arith.constant 0 : i32
    %c0_i32_0 = arith.constant 0 : i32
    %c0_i32_1 = arith.constant 0 : i32
    return %c0_i32, %c0_i32_0 : i32, i32
  }
  func.func @transform_10(%arg0: i32) -> (i32, i32) {
    %c0_i32 = arith.constant 0 : i32
    %c0_i32_0 = arith.constant 0 : i32
    %c0_i32_1 = arith.constant 0 : i32
    return %c0_i32, %c0_i32_0 : i32, i32
  }
  func.func @transform_11(%arg0: i32) -> (i32, i32) {
    %c0_i32 = arith.constant 0 : i32
    %c0_i32_0 = arith.constant 0 : i32
    %c0_i32_1 = arith.constant 0 : i32
    return %c0_i32, %c0_i32_0 : i32, i32
  }
  func.func @transform_12(%arg0: i32) -> (i32, i32) {
    %c0_i32 = arith.constant 0 : i32
    %c0_i32_0 = arith.constant 0 : i32
    %c0_i32_1 = arith.constant 0 : i32
    return %c0_i32, %c0_i32_0 : i32, i32
  }
  func.func @transform_13(%arg0: i32) -> (i32, i32, i32) {
    %c0_i32 = arith.constant 0 : i32
    %c0_i32_0 = arith.constant 0 : i32
    %c0_i32_1 = arith.constant 0 : i32
    return %arg0, %c0_i32, %c0_i32_0 : i32, i32, i32
  }
}

module attributes {stable_mosaic.version = 11 : i64} {
  func.func @_encoder_layer_kernel(%arg0: i32, %arg1: memref<1x8x32xf32, #tpu.memory_space<vmem>>, %arg2: memref<4x32x24xf32, #tpu.memory_space<vmem>>, %arg3: memref<4x1x24xf32, #tpu.memory_space<vmem>>, %arg4: memref<4x8x32xf32, #tpu.memory_space<vmem>>, %arg5: memref<1x32xf32, #tpu.memory_space<vmem>>, %arg6: memref<1x32xf32, #tpu.memory_space<vmem>>, %arg7: memref<1x32xf32, #tpu.memory_space<vmem>>, %arg8: memref<32x64xf32, #tpu.memory_space<vmem>>, %arg9: memref<1x64xf32, #tpu.memory_space<vmem>>, %arg10: memref<64x32xf32, #tpu.memory_space<vmem>>, %arg11: memref<1x32xf32, #tpu.memory_space<vmem>>, %arg12: memref<1x32xf32, #tpu.memory_space<vmem>>, %arg13: memref<1x32xf32, #tpu.memory_space<vmem>>, %arg14: memref<1x8x32xf32, #tpu.memory_space<vmem>>) attributes {dimension_semantics = [#tpu.dimension_semantics<parallel>], iteration_bounds = array<i64: 2>, scalar_prefetch = 0 : i64, scratch_operands = 0 : i64, tpu.core_type = #tpu.core_type<tc>, window_params = [{transform_indices = @transform_0, window_bounds = array<i64: 1, 8, 32>}, {pipeline_mode = #tpu.pipeline_mode<synchronous>, transform_indices = @transform_1, window_bounds = array<i64: 4, 32, 24>}, {pipeline_mode = #tpu.pipeline_mode<synchronous>, transform_indices = @transform_2, window_bounds = array<i64: 4, 1, 24>}, {pipeline_mode = #tpu.pipeline_mode<synchronous>, transform_indices = @transform_3, window_bounds = array<i64: 4, 8, 32>}, {pipeline_mode = #tpu.pipeline_mode<synchronous>, transform_indices = @transform_4, window_bounds = array<i64: 1, 32>}, {pipeline_mode = #tpu.pipeline_mode<synchronous>, transform_indices = @transform_5, window_bounds = array<i64: 1, 32>}, {pipeline_mode = #tpu.pipeline_mode<synchronous>, transform_indices = @transform_6, window_bounds = array<i64: 1, 32>}, {pipeline_mode = #tpu.pipeline_mode<synchronous>, transform_indices = @transform_7, window_bounds = array<i64: 32, 64>}, {pipeline_mode = #tpu.pipeline_mode<synchronous>, transform_indices = @transform_8, window_bounds = array<i64: 1, 64>}, {pipeline_mode = #tpu.pipeline_mode<synchronous>, transform_indices = @transform_9, window_bounds = array<i64: 64, 32>}, {pipeline_mode = #tpu.pipeline_mode<synchronous>, transform_indices = @transform_10, window_bounds = array<i64: 1, 32>}, {pipeline_mode = #tpu.pipeline_mode<synchronous>, transform_indices = @transform_11, window_bounds = array<i64: 1, 32>}, {pipeline_mode = #tpu.pipeline_mode<synchronous>, transform_indices = @transform_12, window_bounds = array<i64: 1, 32>}, {transform_indices = @transform_13, window_bounds = array<i64: 1, 8, 32>}]} {
    %c0 = arith.constant 0 : index
    %c0_0 = arith.constant 0 : index
    %c0_1 = arith.constant 0 : index
    %0 = vector.load %arg1[%c0, %c0_0, %c0_1] : memref<1x8x32xf32, #tpu.memory_space<vmem>>, vector<1x8x32xf32>
    %1 = vector.shape_cast %0 : vector<1x8x32xf32> to vector<8x32xf32>
    %c0_2 = arith.constant 0 : index
    %c0_3 = arith.constant 0 : index
    %2 = vector.load %arg6[%c0_2, %c0_3] : memref<1x32xf32, #tpu.memory_space<vmem>>, vector<1x32xf32>
    %c0_4 = arith.constant 0 : index
    %c0_5 = arith.constant 0 : index
    %3 = vector.load %arg7[%c0_4, %c0_5] : memref<1x32xf32, #tpu.memory_space<vmem>>, vector<1x32xf32>
    %cst = arith.constant dense<0.000000e+00> : vector<8xf32>
    %4 = vector.multi_reduction <add>, %1, %cst [1] : vector<8x32xf32> to vector<8xf32>
    %5 = vector.shape_cast %4 : vector<8xf32> to vector<8x1xf32>
    %cst_6 = arith.constant 3.200000e+01 : f32
    %6 = vector.broadcast %cst_6 : f32 to vector<8x1xf32>
    %7 = arith.divf %5, %6 : vector<8x1xf32>
    %8 = vector.broadcast %7 : vector<8x1xf32> to vector<8x32xf32>
    %9 = arith.subf %1, %8 : vector<8x32xf32>
    %10 = arith.mulf %9, %9 : vector<8x32xf32>
    %cst_7 = arith.constant dense<0.000000e+00> : vector<8xf32>
    %11 = vector.multi_reduction <add>, %10, %cst_7 [1] : vector<8x32xf32> to vector<8xf32>
    %12 = vector.shape_cast %11 : vector<8xf32> to vector<8x1xf32>
    %cst_8 = arith.constant 3.200000e+01 : f32
    %13 = vector.broadcast %cst_8 : f32 to vector<8x1xf32>
    %14 = arith.divf %12, %13 : vector<8x1xf32>
    %15 = vector.broadcast %7 : vector<8x1xf32> to vector<8x32xf32>
    %16 = arith.subf %1, %15 : vector<8x32xf32>
    %cst_9 = arith.constant 9.99999974E-6 : f32
    %17 = vector.broadcast %cst_9 : f32 to vector<8x1xf32>
    %18 = arith.addf %14, %17 : vector<8x1xf32>
    %19 = math.rsqrt %18 : vector<8x1xf32>
    %20 = vector.broadcast %19 : vector<8x1xf32> to vector<8x32xf32>
    %21 = arith.mulf %16, %20 : vector<8x32xf32>
    %22 = vector.broadcast %2 : vector<1x32xf32> to vector<8x32xf32>
    %23 = arith.mulf %21, %22 : vector<8x32xf32>
    %24 = vector.broadcast %3 : vector<1x32xf32> to vector<8x32xf32>
    %25 = arith.addf %23, %24 : vector<8x32xf32>
    %26 = vector.shape_cast %25 : vector<8x32xf32> to vector<1x8x32xf32>
    %27 = vector.shape_cast %26 : vector<1x8x32xf32> to vector<1x8x32xf32>
    %28 = vector.broadcast %27 : vector<1x8x32xf32> to vector<4x8x32xf32>
    %c0_10 = arith.constant 0 : index
    %c0_11 = arith.constant 0 : index
    %c0_12 = arith.constant 0 : index
    %29 = vector.load %arg2[%c0_10, %c0_11, %c0_12] : memref<4x32x24xf32, #tpu.memory_space<vmem>>, vector<4x32x24xf32>
    "tpu.trace_start"() <{level = 10 : i32, message = "hsd,hde->hse"}> : () -> ()
    %cst_13 = arith.constant dense<0.000000e+00> : vector<4x8x24xf32>
    %30 = tpu.matmul %28, %29, %cst_13 {dimension_numbers = #tpu.dot_dimension_numbers<[2], [1], [1], [2], [0, 0, 0, 1, 1, 2], [0], [0]>} : vector<4x8x32xf32>, vector<4x32x24xf32>, vector<4x8x24xf32> -> vector<4x8x24xf32>
    "tpu.trace_stop"() : () -> ()
    %c0_14 = arith.constant 0 : index
    %c0_15 = arith.constant 0 : index
    %c0_16 = arith.constant 0 : index
    %31 = vector.load %arg3[%c0_14, %c0_15, %c0_16] : memref<4x1x24xf32, #tpu.memory_space<vmem>>, vector<4x1x24xf32>
    %32 = vector.broadcast %31 : vector<4x1x24xf32> to vector<4x8x24xf32>
    %33 = arith.addf %30, %32 : vector<4x8x24xf32>
    %34 = vector.extract_strided_slice %33 {offsets = [0, 0, 0], sizes = [4, 8, 8], strides = [1, 1, 1]} : vector<4x8x24xf32> to vector<4x8x8xf32>
    %cst_17 = arith.constant 0.353553385 : f32
    %35 = vector.broadcast %cst_17 : f32 to vector<4x8x8xf32>
    %36 = arith.mulf %34, %35 : vector<4x8x8xf32>
    %37 = vector.extract_strided_slice %33 {offsets = [0, 0, 8], sizes = [4, 8, 8], strides = [1, 1, 1]} : vector<4x8x24xf32> to vector<4x8x8xf32>
    %38 = vector.extract_strided_slice %33 {offsets = [0, 0, 16], sizes = [4, 8, 8], strides = [1, 1, 1]} : vector<4x8x24xf32> to vector<4x8x8xf32>
    "tpu.trace_start"() <{level = 10 : i32, message = "hqd,hkd->hqk"}> : () -> ()
    %cst_18 = arith.constant dense<0.000000e+00> : vector<4x8x8xf32>
    %39 = tpu.matmul %36, %37, %cst_18 {dimension_numbers = #tpu.dot_dimension_numbers<[2], [2], [1], [1], [0, 0, 0, 1, 1, 1], [0], [0]>} : vector<4x8x8xf32>, vector<4x8x8xf32>, vector<4x8x8xf32> -> vector<4x8x8xf32>
    "tpu.trace_stop"() : () -> ()
    %cst_19 = arith.constant dense<0xFF800000> : vector<4x8xf32>
    %40 = vector.multi_reduction <maximumf>, %39, %cst_19 [2] : vector<4x8x8xf32> to vector<4x8xf32>
    %41 = vector.shape_cast %40 : vector<4x8xf32> to vector<4x8x1xf32>
    %42 = vector.broadcast %41 : vector<4x8x1xf32> to vector<4x8x8xf32>
    %43 = arith.subf %39, %42 : vector<4x8x8xf32>
    %44 = math.exp %43 : vector<4x8x8xf32>
    %cst_20 = arith.constant dense<0.000000e+00> : vector<4x8xf32>
    %45 = vector.multi_reduction <add>, %44, %cst_20 [2] : vector<4x8x8xf32> to vector<4x8xf32>
    %46 = vector.shape_cast %45 : vector<4x8xf32> to vector<4x8x1xf32>
    %47 = tpu.reciprocal %46 {approx = true} : vector<4x8x1xf32> -> vector<4x8x1xf32>
    %48 = vector.broadcast %47 : vector<4x8x1xf32> to vector<4x8x8xf32>
    %49 = arith.mulf %44, %48 : vector<4x8x8xf32>
    "tpu.trace_start"() <{level = 10 : i32, message = "hqk,hkd->hqd"}> : () -> ()
    %cst_21 = arith.constant dense<0.000000e+00> : vector<4x8x8xf32>
    %50 = tpu.matmul %49, %38, %cst_21 {dimension_numbers = #tpu.dot_dimension_numbers<[2], [1], [1], [2], [0, 0, 0, 1, 1, 2], [0], [0]>} : vector<4x8x8xf32>, vector<4x8x8xf32>, vector<4x8x8xf32> -> vector<4x8x8xf32>
    "tpu.trace_stop"() : () -> ()
    %c0_22 = arith.constant 0 : index
    %c0_23 = arith.constant 0 : index
    %c0_24 = arith.constant 0 : index
    %51 = vector.load %arg4[%c0_22, %c0_23, %c0_24] : memref<4x8x32xf32, #tpu.memory_space<vmem>>, vector<4x8x32xf32>
    "tpu.trace_start"() <{level = 10 : i32, message = "hqd,hdo->hqo"}> : () -> ()
    %cst_25 = arith.constant dense<0.000000e+00> : vector<4x8x32xf32>
    %52 = tpu.matmul %50, %51, %cst_25 {dimension_numbers = #tpu.dot_dimension_numbers<[2], [1], [1], [2], [0, 0, 0, 1, 1, 2], [0], [0]>} : vector<4x8x8xf32>, vector<4x8x32xf32>, vector<4x8x32xf32> -> vector<4x8x32xf32>
    "tpu.trace_stop"() : () -> ()
    %cst_26 = arith.constant dense<0.000000e+00> : vector<8x32xf32>
    %53 = vector.multi_reduction <add>, %52, %cst_26 [0] : vector<4x8x32xf32> to vector<8x32xf32>
    %c0_27 = arith.constant 0 : index
    %c0_28 = arith.constant 0 : index
    %54 = vector.load %arg5[%c0_27, %c0_28] : memref<1x32xf32, #tpu.memory_space<vmem>>, vector<1x32xf32>
    %55 = vector.broadcast %54 : vector<1x32xf32> to vector<8x32xf32>
    %56 = arith.addf %53, %55 : vector<8x32xf32>
    %57 = arith.addf %1, %56 : vector<8x32xf32>
    %c0_29 = arith.constant 0 : index
    %c0_30 = arith.constant 0 : index
    %58 = vector.load %arg12[%c0_29, %c0_30] : memref<1x32xf32, #tpu.memory_space<vmem>>, vector<1x32xf32>
    %c0_31 = arith.constant 0 : index
    %c0_32 = arith.constant 0 : index
    %59 = vector.load %arg13[%c0_31, %c0_32] : memref<1x32xf32, #tpu.memory_space<vmem>>, vector<1x32xf32>
    %cst_33 = arith.constant dense<0.000000e+00> : vector<8xf32>
    %60 = vector.multi_reduction <add>, %57, %cst_33 [1] : vector<8x32xf32> to vector<8xf32>
    %61 = vector.shape_cast %60 : vector<8xf32> to vector<8x1xf32>
    %cst_34 = arith.constant 3.200000e+01 : f32
    %62 = vector.broadcast %cst_34 : f32 to vector<8x1xf32>
    %63 = arith.divf %61, %62 : vector<8x1xf32>
    %64 = vector.broadcast %63 : vector<8x1xf32> to vector<8x32xf32>
    %65 = arith.subf %57, %64 : vector<8x32xf32>
    %66 = arith.mulf %65, %65 : vector<8x32xf32>
    %cst_35 = arith.constant dense<0.000000e+00> : vector<8xf32>
    %67 = vector.multi_reduction <add>, %66, %cst_35 [1] : vector<8x32xf32> to vector<8xf32>
    %68 = vector.shape_cast %67 : vector<8xf32> to vector<8x1xf32>
    %cst_36 = arith.constant 3.200000e+01 : f32
    %69 = vector.broadcast %cst_36 : f32 to vector<8x1xf32>
    %70 = arith.divf %68, %69 : vector<8x1xf32>
    %71 = vector.broadcast %63 : vector<8x1xf32> to vector<8x32xf32>
    %72 = arith.subf %57, %71 : vector<8x32xf32>
    %cst_37 = arith.constant 9.99999974E-6 : f32
    %73 = vector.broadcast %cst_37 : f32 to vector<8x1xf32>
    %74 = arith.addf %70, %73 : vector<8x1xf32>
    %75 = math.rsqrt %74 : vector<8x1xf32>
    %76 = vector.broadcast %75 : vector<8x1xf32> to vector<8x32xf32>
    %77 = arith.mulf %72, %76 : vector<8x32xf32>
    %78 = vector.broadcast %58 : vector<1x32xf32> to vector<8x32xf32>
    %79 = arith.mulf %77, %78 : vector<8x32xf32>
    %80 = vector.broadcast %59 : vector<1x32xf32> to vector<8x32xf32>
    %81 = arith.addf %79, %80 : vector<8x32xf32>
    %c0_38 = arith.constant 0 : index
    %c0_39 = arith.constant 0 : index
    %82 = vector.load %arg8[%c0_38, %c0_39] : memref<32x64xf32, #tpu.memory_space<vmem>>, vector<32x64xf32>
    %cst_40 = arith.constant dense<0.000000e+00> : vector<8x64xf32>
    %83 = tpu.matmul %81, %82, %cst_40 {dimension_numbers = #tpu.dot_dimension_numbers<[1], [0], [0], [1], [0, 0, 1, 1], [], []>} : vector<8x32xf32>, vector<32x64xf32>, vector<8x64xf32> -> vector<8x64xf32>
    %c0_41 = arith.constant 0 : index
    %c0_42 = arith.constant 0 : index
    %84 = vector.load %arg9[%c0_41, %c0_42] : memref<1x64xf32, #tpu.memory_space<vmem>>, vector<1x64xf32>
    %85 = vector.broadcast %84 : vector<1x64xf32> to vector<8x64xf32>
    %86 = arith.addf %83, %85 : vector<8x64xf32>
    %87 = arith.mulf %86, %86 : vector<8x64xf32>
    %88 = arith.mulf %86, %87 : vector<8x64xf32>
    %cst_43 = arith.constant 4.471500e-02 : f32
    %89 = vector.broadcast %cst_43 : f32 to vector<8x64xf32>
    %90 = arith.mulf %89, %88 : vector<8x64xf32>
    %91 = arith.addf %86, %90 : vector<8x64xf32>
    %cst_44 = arith.constant 0.797884583 : f32
    %92 = vector.broadcast %cst_44 : f32 to vector<8x64xf32>
    %93 = arith.mulf %92, %91 : vector<8x64xf32>
    %94 = math.tanh %93 : vector<8x64xf32>
    %cst_45 = arith.constant 1.000000e+00 : f32
    %95 = vector.broadcast %cst_45 : f32 to vector<8x64xf32>
    %96 = arith.addf %95, %94 : vector<8x64xf32>
    %cst_46 = arith.constant 5.000000e-01 : f32
    %97 = vector.broadcast %cst_46 : f32 to vector<8x64xf32>
    %98 = arith.mulf %97, %96 : vector<8x64xf32>
    %99 = arith.mulf %86, %98 : vector<8x64xf32>
    %c0_47 = arith.constant 0 : index
    %c0_48 = arith.constant 0 : index
    %100 = vector.load %arg10[%c0_47, %c0_48] : memref<64x32xf32, #tpu.memory_space<vmem>>, vector<64x32xf32>
    %cst_49 = arith.constant dense<0.000000e+00> : vector<8x32xf32>
    %101 = tpu.matmul %99, %100, %cst_49 {dimension_numbers = #tpu.dot_dimension_numbers<[1], [0], [0], [1], [0, 0, 1, 1], [], []>} : vector<8x64xf32>, vector<64x32xf32>, vector<8x32xf32> -> vector<8x32xf32>
    %c0_50 = arith.constant 0 : index
    %c0_51 = arith.constant 0 : index
    %102 = vector.load %arg11[%c0_50, %c0_51] : memref<1x32xf32, #tpu.memory_space<vmem>>, vector<1x32xf32>
    %103 = vector.broadcast %102 : vector<1x32xf32> to vector<8x32xf32>
    %104 = arith.addf %101, %103 : vector<8x32xf32>
    %105 = arith.addf %57, %104 : vector<8x32xf32>
    %c0_52 = arith.constant 0 : index
    %c0_53 = arith.constant 0 : index
    %c0_54 = arith.constant 0 : index
    %106 = vector.load %arg14[%c0_52, %c0_53, %c0_54] : memref<1x8x32xf32, #tpu.memory_space<vmem>>, vector<1x8x32xf32>
    %107 = vector.shape_cast %106 : vector<1x8x32xf32> to vector<8x32xf32>
    %108 = vector.shape_cast %105 : vector<8x32xf32> to vector<1x8x32xf32>
    tpu.vector_store %arg14[%c0_52, %c0_53, %c0_54], %108 {strides = array<i32>} : memref<1x8x32xf32, #tpu.memory_space<vmem>>, vector<1x8x32xf32>,
    return
  }
  func.func @transform_0(%arg0: i32) -> (i32, i32, i32) {
    %c0_i32 = arith.constant 0 : i32
    %c0_i32_0 = arith.constant 0 : i32
    %c0_i32_1 = arith.constant 0 : i32
    return %arg0, %c0_i32, %c0_i32_0 : i32, i32, i32
  }
  func.func @transform_1(%arg0: i32) -> (i32, i32, i32) {
    %c0_i32 = arith.constant 0 : i32
    %c0_i32_0 = arith.constant 0 : i32
    %c0_i32_1 = arith.constant 0 : i32
    %c0_i32_2 = arith.constant 0 : i32
    return %c0_i32, %c0_i32_0, %c0_i32_1 : i32, i32, i32
  }
  func.func @transform_2(%arg0: i32) -> (i32, i32, i32) {
    %c0_i32 = arith.constant 0 : i32
    %c0_i32_0 = arith.constant 0 : i32
    %c0_i32_1 = arith.constant 0 : i32
    %c0_i32_2 = arith.constant 0 : i32
    return %c0_i32, %c0_i32_0, %c0_i32_1 : i32, i32, i32
  }
  func.func @transform_3(%arg0: i32) -> (i32, i32, i32) {
    %c0_i32 = arith.constant 0 : i32
    %c0_i32_0 = arith.constant 0 : i32
    %c0_i32_1 = arith.constant 0 : i32
    %c0_i32_2 = arith.constant 0 : i32
    return %c0_i32, %c0_i32_0, %c0_i32_1 : i32, i32, i32
  }
  func.func @transform_4(%arg0: i32) -> (i32, i32) {
    %c0_i32 = arith.constant 0 : i32
    %c0_i32_0 = arith.constant 0 : i32
    %c0_i32_1 = arith.constant 0 : i32
    return %c0_i32, %c0_i32_0 : i32, i32
  }
  func.func @transform_5(%arg0: i32) -> (i32, i32) {
    %c0_i32 = arith.constant 0 : i32
    %c0_i32_0 = arith.constant 0 : i32
    %c0_i32_1 = arith.constant 0 : i32
    return %c0_i32, %c0_i32_0 : i32, i32
  }
  func.func @transform_6(%arg0: i32) -> (i32, i32) {
    %c0_i32 = arith.constant 0 : i32
    %c0_i32_0 = arith.constant 0 : i32
    %c0_i32_1 = arith.constant 0 : i32
    return %c0_i32, %c0_i32_0 : i32, i32
  }
  func.func @transform_7(%arg0: i32) -> (i32, i32) {
    %c0_i32 = arith.constant 0 : i32
    %c0_i32_0 = arith.constant 0 : i32
    %c0_i32_1 = arith.constant 0 : i32
    return %c0_i32, %c0_i32_0 : i32, i32
  }
  func.func @transform_8(%arg0: i32) -> (i32, i32) {
    %c0_i32 = arith.constant 0 : i32
    %c0_i32_0 = arith.constant 0 : i32
    %c0_i32_1 = arith.constant 0 : i32
    return %c0_i32, %c0_i32_0 : i32, i32
  }
  func.func @transform_9(%arg0: i32) -> (i32, i32) {
    %c0_i32 = arith.constant 0 : i32
    %c0_i32_0 = arith.constant 0 : i32
    %c0_i32_1 = arith.constant 0 : i32
    return %c0_i32, %c0_i32_0 : i32, i32
  }
  func.func @transform_10(%arg0: i32) -> (i32, i32) {
    %c0_i32 = arith.constant 0 : i32
    %c0_i32_0 = arith.constant 0 : i32
    %c0_i32_1 = arith.constant 0 : i32
    return %c0_i32, %c0_i32_0 : i32, i32
  }
  func.func @transform_11(%arg0: i32) -> (i32, i32) {
    %c0_i32 = arith.constant 0 : i32
    %c0_i32_0 = arith.constant 0 : i32
    %c0_i32_1 = arith.constant 0 : i32
    return %c0_i32, %c0_i32_0 : i32, i32
  }
  func.func @transform_12(%arg0: i32) -> (i32, i32) {
    %c0_i32 = arith.constant 0 : i32
    %c0_i32_0 = arith.constant 0 : i32
    %c0_i32_1 = arith.constant 0 : i32
    return %c0_i32, %c0_i32_0 : i32, i32
  }
  func.func @transform_13(%arg0: i32) -> (i32, i32, i32) {
    %c0_i32 = arith.constant 0 : i32
    %c0_i32_0 = arith.constant 0 : i32
    %c0_i32_1 = arith.constant 0 : i32
    return %arg0, %c0_i32, %c0_i32_0 : i32, i32, i32
  }
}

</mosaic_0001>

<llo_original>
// kernel: tpu_custom_call.1
$region0: #{tpu_custom_call.1}
  #allocation0 [shape = 'u32[]', space=smem, size = 0x4, offset = 0x4, fixed_abs, tag = 'smem constant byte address 0x4 - core index']
  #allocation1 [shape = 'u32[72,128]{1,0:T(1,128)}', space=vmem, size = 0x9000, scoped, tag = 'internal scratch']
  %s0 = inlined_call_operand.vmem [shape: f32[2,8,32], index: 0, kind: input, shape index: {}]
  %s1 = inlined_call_operand.vmem [shape: f32[4,32,24], index: 1, kind: input, shape index: {}]
  %s2 = inlined_call_operand.vmem [shape: f32[4,1,24], index: 2, kind: input, shape index: {}]
  %s3 = inlined_call_operand.vmem [shape: f32[4,8,32], index: 3, kind: input, shape index: {}]
  %s4 = inlined_call_operand.vmem [shape: f32[1,32], index: 4, kind: input, shape index: {}]
  %s5 = inlined_call_operand.vmem [shape: f32[1,32], index: 5, kind: input, shape index: {}]
  %s6 = inlined_call_operand.vmem [shape: f32[1,32], index: 6, kind: input, shape index: {}]
  %s7 = inlined_call_operand.vmem [shape: f32[32,64], index: 7, kind: input, shape index: {}]
  %s8 = inlined_call_operand.vmem [shape: f32[1,64], index: 8, kind: input, shape index: {}]
  %s9 = inlined_call_operand.vmem [shape: f32[64,32], index: 9, kind: input, shape index: {}]
  %s10 = inlined_call_operand.vmem [shape: f32[1,32], index: 10, kind: input, shape index: {}]
  %s11 = inlined_call_operand.vmem [shape: f32[1,32], index: 11, kind: input, shape index: {}]
  %s12 = inlined_call_operand.vmem [shape: f32[1,32], index: 12, kind: input, shape index: {}]
  %s13 = inlined_call_operand.hbm [shape: f32[2,8,32], index: 13, kind: output, shape index: {}]
  %s14 = sld [smem:[#allocation0]]
  $region85: #{tpu_custom_call.1} parent=0
    _
  %s16 = ssub.s32 1, %s14
  %s17 = scalar_select 0, %s16, %s14
  $region1: #{tpu_custom_call.1} parent=0
    #allocation2 [shape = 'u8[8192]{0}', space=vmem, size = 0x2000, scoped, tag = 'output window, operand 0']
    #allocation3 [shape = 's32[2]{0}', space=sflag, size = 0x8, scoped, tag = 'scoped memory for tpu_custom_call.1']
    %18 = vsyncpa [#allocation3], 0
    %s19 = scalar_lea.sflag [#allocation3], 1
    %20 = vsyncpa %s19, 0
    loop: start=0, step=1, limit=4
    $region2: #{tpu_custom_call.1} parent=1 // loop_pre_header
      _
    $region3: #{tpu_custom_call.1} parent=1 // loop_header
      %s22 = sphi 0, %s26
      %p23 = scmp.ge.s32.totalorder %s22, 4
      %s32 = sphi 0, %s34
      %s35 = sphi 0, %s32
      %s36 = sphi 0, %s35
      %s52 = sphi 0, %s36
      %s56 = sphi 0, %s56
      %s58 = sphi 0, %s56
      %s59 = sphi 0, %s58
      %s73 = sphi 0, %s59
      %s77 = sphi 0, %s77
      %s79 = sphi 0, %s77
      %s80 = sphi 0, %s79
      %s94 = sphi 0, %s80
      %s98 = sphi 0, %s98
      %s100 = sphi 0, %s98
      %s101 = sphi 0, %s100
      %s115 = sphi 0, %s101
      %s119 = sphi 0, %s119
      %s121 = sphi 0, %s119
      %s122 = sphi 0, %s121
      %s136 = sphi 0, %s122
      %s140 = sphi 0, %s140
      %s142 = sphi 0, %s140
      %s143 = sphi 0, %s142
      %s157 = sphi 0, %s143
      %s161 = sphi 0, %s161
      %s163 = sphi 0, %s161
      %s164 = sphi 0, %s163
      %s178 = sphi 0, %s164
      %s182 = sphi 0, %s182
      %s184 = sphi 0, %s182
      %s185 = sphi 0, %s184
      %s199 = sphi 0, %s185
      %s203 = sphi 0, %s203
      %s205 = sphi 0, %s203
      %s206 = sphi 0, %s205
      %s220 = sphi 0, %s206
      %s224 = sphi 0, %s224
      %s226 = sphi 0, %s224
      %s227 = sphi 0, %s226
      %s241 = sphi 0, %s227
      %s245 = sphi 0, %s245
      %s247 = sphi 0, %s245
      %s248 = sphi 0, %s247
      %s262 = sphi 0, %s248
      %s266 = sphi 0, %s266
      %s268 = sphi 0, %s266
      %s269 = sphi 0, %s268
      %s283 = sphi 0, %s269
      %s287 = sphi 0, %s287
      %s289 = sphi 0, %s287
      %s290 = sphi 0, %s289
      %s304 = sphi 0, %s290
      %s310 = sphi 0, %s312
      %s313 = sphi 0, %s310
      %s314 = sphi 0, %s313
      %s330 = sphi 0, %s314
    $region4: #{tpu_custom_call.1} parent=1 // loop_header_branch
      %25 = sbr.rel (%p23) target = $region8
    $region5: #{tpu_custom_call.1} parent=1 // loop_body
      %s27 = ssub.s32 %s22, 1
      %s28 = ssub.s32 %s22, 2
      %s29 = sadd.s32 %s22, 1
      %s30 = ssub.s32 %s22, %s29
      %p31 = scmp.eq.s32.totalorder %s30, 0
      %s33 = sadd.s32 %s32, 1
      %s34 = scalar_select %p31, %s32, %s33
      %p37 = pneg %p31
      %p38 = scmp.eq.s32.totalorder %s22, 1
      %p39 = por %p37, %p38
      %p40 = scmp.ne.s32.totalorder %s32, %s35
      %p41 = scmp.eq.s32.totalorder %s22, 0
      %p42 = por %p40, %p41
      %p43 = scmp.ne.s32.totalorder %s32, %s35
      %p44 = scmp.eq.s32.totalorder %s27, 1
      %p45 = por %p43, %p44
      %p46 = scmp.ne.s32.totalorder %s35, %s36
      %p47 = scmp.eq.s32.totalorder %s27, 0
      %p48 = por %p46, %p47
      %p49 = scmp.ne.s32.totalorder %s35, %s36
      %p50 = scmp.eq.s32.totalorder %s28, 1
      %p51 = por %p49, %p50
      %p53 = scmp.ne.s32.totalorder %s36, %s52
      %p54 = scmp.eq.s32.totalorder %s28, 0
      %p55 = por %p53, %p54
      %s57 = sadd.s32 %s56, 1
      %p60 = scmp.eq.s32.totalorder %s22, 1
      %p61 = scmp.ne.s32.totalorder %s56, %s58
      %p62 = scmp.eq.s32.totalorder %s22, 0
      %p63 = por %p61, %p62
      %p64 = scmp.ne.s32.totalorder %s56, %s58
      %p65 = scmp.eq.s32.totalorder %s27, 1
      %p66 = por %p64, %p65
      %p67 = scmp.ne.s32.totalorder %s58, %s59
      %p68 = scmp.eq.s32.totalorder %s27, 0
      %p69 = por %p67, %p68
      %p70 = scmp.ne.s32.totalorder %s58, %s59
      %p71 = scmp.eq.s32.totalorder %s28, 1
      %p72 = por %p70, %p71
      %p74 = scmp.ne.s32.totalorder %s59, %s73
      %p75 = scmp.eq.s32.totalorder %s28, 0
      %p76 = por %p74, %p75
      %s78 = sadd.s32 %s77, 1
      %p81 = scmp.eq.s32.totalorder %s22, 1
      %p82 = scmp.ne.s32.totalorder %s77, %s79
      %p83 = scmp.eq.s32.totalorder %s22, 0
      %p84 = por %p82, %p83
      %p85 = scmp.ne.s32.totalorder %s77, %s79
      %p86 = scmp.eq.s32.totalorder %s27, 1
      %p87 = por %p85, %p86
      %p88 = scmp.ne.s32.totalorder %s79, %s80
      %p89 = scmp.eq.s32.totalorder %s27, 0
      %p90 = por %p88, %p89
      %p91 = scmp.ne.s32.totalorder %s79, %s80
      %p92 = scmp.eq.s32.totalorder %s28, 1
      %p93 = por %p91, %p92
      %p95 = scmp.ne.s32.totalorder %s80, %s94
      %p96 = scmp.eq.s32.totalorder %s28, 0
      %p97 = por %p95, %p96
      %s99 = sadd.s32 %s98, 1
      %p102 = scmp.eq.s32.totalorder %s22, 1
      %p103 = scmp.ne.s32.totalorder %s98, %s100
      %p104 = scmp.eq.s32.totalorder %s22, 0
      %p105 = por %p103, %p104
      %p106 = scmp.ne.s32.totalorder %s98, %s100
      %p107 = scmp.eq.s32.totalorder %s27, 1
      %p108 = por %p106, %p107
      %p109 = scmp.ne.s32.totalorder %s100, %s101
      %p110 = scmp.eq.s32.totalorder %s27, 0
      %p111 = por %p109, %p110
      %p112 = scmp.ne.s32.totalorder %s100, %s101
      %p113 = scmp.eq.s32.totalorder %s28, 1
      %p114 = por %p112, %p113
      %p116 = scmp.ne.s32.totalorder %s101, %s115
      %p117 = scmp.eq.s32.totalorder %s28, 0
      %p118 = por %p116, %p117
      %s120 = sadd.s32 %s119, 1
      %p123 = scmp.eq.s32.totalorder %s22, 1
      %p124 = scmp.ne.s32.totalorder %s119, %s121
      %p125 = scmp.eq.s32.totalorder %s22, 0
      %p126 = por %p124, %p125
      %p127 = scmp.ne.s32.totalorder %s119, %s121
      %p128 = scmp.eq.s32.totalorder %s27, 1
      %p129 = por %p127, %p128
      %p130 = scmp.ne.s32.totalorder %s121, %s122
      %p131 = scmp.eq.s32.totalorder %s27, 0
      %p132 = por %p130, %p131
      %p133 = scmp.ne.s32.totalorder %s121, %s122
      %p134 = scmp.eq.s32.totalorder %s28, 1
      %p135 = por %p133, %p134
      %p137 = scmp.ne.s32.totalorder %s122, %s136
      %p138 = scmp.eq.s32.totalorder %s28, 0
      %p139 = por %p137, %p138
      %s141 = sadd.s32 %s140, 1
      %p144 = scmp.eq.s32.totalorder %s22, 1
      %p145 = scmp.ne.s32.totalorder %s140, %s142
      %p146 = scmp.eq.s32.totalorder %s22, 0
      %p147 = por %p145, %p146
      %p148 = scmp.ne.s32.totalorder %s140, %s142
      %p149 = scmp.eq.s32.totalorder %s27, 1
      %p150 = por %p148, %p149
      %p151 = scmp.ne.s32.totalorder %s142, %s143
      %p152 = scmp.eq.s32.totalorder %s27, 0
      %p153 = por %p151, %p152
      %p154 = scmp.ne.s32.totalorder %s142, %s143
      %p155 = scmp.eq.s32.totalorder %s28, 1
      %p156 = por %p154, %p155
      %p158 = scmp.ne.s32.totalorder %s143, %s157
      %p159 = scmp.eq.s32.totalorder %s28, 0
      %p160 = por %p158, %p159
      %s162 = sadd.s32 %s161, 1
      %p165 = scmp.eq.s32.totalorder %s22, 1
      %p166 = scmp.ne.s32.totalorder %s161, %s163
      %p167 = scmp.eq.s32.totalorder %s22, 0
      %p168 = por %p166, %p167
      %p169 = scmp.ne.s32.totalorder %s161, %s163
      %p170 = scmp.eq.s32.totalorder %s27, 1
      %p171 = por %p169, %p170
      %p172 = scmp.ne.s32.totalorder %s163, %s164
      %p173 = scmp.eq.s32.totalorder %s27, 0
      %p174 = por %p172, %p173
      %p175 = scmp.ne.s32.totalorder %s163, %s164
      %p176 = scmp.eq.s32.totalorder %s28, 1
      %p177 = por %p175, %p176
      %p179 = scmp.ne.s32.totalorder %s164, %s178
      %p180 = scmp.eq.s32.totalorder %s28, 0
      %p181 = por %p179, %p180
      %s183 = sadd.s32 %s182, 1
      %p186 = scmp.eq.s32.totalorder %s22, 1
      %p187 = scmp.ne.s32.totalorder %s182, %s184
      %p188 = scmp.eq.s32.totalorder %s22, 0
      %p189 = por %p187, %p188
      %p190 = scmp.ne.s32.totalorder %s182, %s184
      %p191 = scmp.eq.s32.totalorder %s27, 1
      %p192 = por %p190, %p191
      %p193 = scmp.ne.s32.totalorder %s184, %s185
      %p194 = scmp.eq.s32.totalorder %s27, 0
      %p195 = por %p193, %p194
      %p196 = scmp.ne.s32.totalorder %s184, %s185
      %p197 = scmp.eq.s32.totalorder %s28, 1
      %p198 = por %p196, %p197
      %p200 = scmp.ne.s32.totalorder %s185, %s199
      %p201 = scmp.eq.s32.totalorder %s28, 0
      %p202 = por %p200, %p201
      %s204 = sadd.s32 %s203, 1
      %p207 = scmp.eq.s32.totalorder %s22, 1
      %p208 = scmp.ne.s32.totalorder %s203, %s205
      %p209 = scmp.eq.s32.totalorder %s22, 0
      %p210 = por %p208, %p209
      %p211 = scmp.ne.s32.totalorder %s203, %s205
      %p212 = scmp.eq.s32.totalorder %s27, 1
      %p213 = por %p211, %p212
      %p214 = scmp.ne.s32.totalorder %s205, %s206
      %p215 = scmp.eq.s32.totalorder %s27, 0
      %p216 = por %p214, %p215
      %p217 = scmp.ne.s32.totalorder %s205, %s206
      %p218 = scmp.eq.s32.totalorder %s28, 1
      %p219 = por %p217, %p218
      %p221 = scmp.ne.s32.totalorder %s206, %s220
      %p222 = scmp.eq.s32.totalorder %s28, 0
      %p223 = por %p221, %p222
      %s225 = sadd.s32 %s224, 1
      %p228 = scmp.eq.s32.totalorder %s22, 1
      %p229 = scmp.ne.s32.totalorder %s224, %s226
      %p230 = scmp.eq.s32.totalorder %s22, 0
      %p231 = por %p229, %p230
      %p232 = scmp.ne.s32.totalorder %s224, %s226
      %p233 = scmp.eq.s32.totalorder %s27, 1
      %p234 = por %p232, %p233
      %p235 = scmp.ne.s32.totalorder %s226, %s227
      %p236 = scmp.eq.s32.totalorder %s27, 0
      %p237 = por %p235, %p236
      %p238 = scmp.ne.s32.totalorder %s226, %s227
      %p239 = scmp.eq.s32.totalorder %s28, 1
      %p240 = por %p238, %p239
      %p242 = scmp.ne.s32.totalorder %s227, %s241
      %p243 = scmp.eq.s32.totalorder %s28, 0
      %p244 = por %p242, %p243
      %s246 = sadd.s32 %s245, 1
      %p249 = scmp.eq.s32.totalorder %s22, 1
      %p250 = scmp.ne.s32.totalorder %s245, %s247
      %p251 = scmp.eq.s32.totalorder %s22, 0
      %p252 = por %p250, %p251
      %p253 = scmp.ne.s32.totalorder %s245, %s247
      %p254 = scmp.eq.s32.totalorder %s27, 1
      %p255 = por %p253, %p254
      %p256 = scmp.ne.s32.totalorder %s247, %s248
      %p257 = scmp.eq.s32.totalorder %s27, 0
      %p258 = por %p256, %p257
      %p259 = scmp.ne.s32.totalorder %s247, %s248
      %p260 = scmp.eq.s32.totalorder %s28, 1
      %p261 = por %p259, %p260
      %p263 = scmp.ne.s32.totalorder %s248, %s262
      %p264 = scmp.eq.s32.totalorder %s28, 0
      %p265 = por %p263, %p264
      %s267 = sadd.s32 %s266, 1
      %p270 = scmp.eq.s32.totalorder %s22, 1
      %p271 = scmp.ne.s32.totalorder %s266, %s268
      %p272 = scmp.eq.s32.totalorder %s22, 0
      %p273 = por %p271, %p272
      %p274 = scmp.ne.s32.totalorder %s266, %s268
      %p275 = scmp.eq.s32.totalorder %s27, 1
      %p276 = por %p274, %p275
      %p277 = scmp.ne.s32.totalorder %s268, %s269
      %p278 = scmp.eq.s32.totalorder %s27, 0
      %p279 = por %p277, %p278
      %p280 = scmp.ne.s32.totalorder %s268, %s269
      %p281 = scmp.eq.s32.totalorder %s28, 1
      %p282 = por %p280, %p281
      %p284 = scmp.ne.s32.totalorder %s269, %s283
      %p285 = scmp.eq.s32.totalorder %s28, 0
      %p286 = por %p284, %p285
      %s288 = sadd.s32 %s287, 1
      %p291 = scmp.eq.s32.totalorder %s22, 1
      %p292 = scmp.ne.s32.totalorder %s287, %s289
      %p293 = scmp.eq.s32.totalorder %s22, 0
      %p294 = por %p292, %p293
      %p295 = scmp.ne.s32.totalorder %s287, %s289
      %p296 = scmp.eq.s32.totalorder %s27, 1
      %p297 = por %p295, %p296
      %p298 = scmp.ne.s32.totalorder %s289, %s290
      %p299 = scmp.eq.s32.totalorder %s27, 0
      %p300 = por %p298, %p299
      %p301 = scmp.ne.s32.totalorder %s289, %s290
      %p302 = scmp.eq.s32.totalorder %s28, 1
      %p303 = por %p301, %p302
      %p305 = scmp.ne.s32.totalorder %s290, %s304
      %p306 = scmp.eq.s32.totalorder %s28, 0
      %p307 = por %p305, %p306
      %s308 = ssub.s32 %s22, %s29
      %p309 = scmp.eq.s32.totalorder %s308, 0
      %s311 = sadd.s32 %s310, 1
      %s312 = scalar_select %p309, %s310, %s311
      %p315 = pneg %p309
      %p316 = scmp.eq.s32.totalorder %s22, 1
      %p317 = por %p315, %p316
      %p318 = scmp.ne.s32.totalorder %s310, %s313
      %p319 = scmp.eq.s32.totalorder %s22, 0
      %p320 = por %p318, %p319
      %p321 = scmp.ne.s32.totalorder %s310, %s313
      %p322 = scmp.eq.s32.totalorder %s27, 1
      %p323 = por %p321, %p322
      %p324 = scmp.ne.s32.totalorder %s313, %s314
      %p325 = scmp.eq.s32.totalorder %s27, 0
      %p326 = por %p324, %p325
      %p327 = scmp.ne.s32.totalorder %s313, %s314
      %p328 = scmp.eq.s32.totalorder %s28, 1
      %p329 = por %p327, %p328
      %p331 = scmp.ne.s32.totalorder %s314, %s330
      %p332 = scmp.eq.s32.totalorder %s28, 0
      %p333 = por %p331, %p332
      %p334 = scmp.le.s32.totalorder 1, %s22
      %p335 = scmp.lt.s32.totalorder %s22, 3
      %p336 = pnand %p334, %p335
      %p337 = pneg %p336
      // Predicated region
      $region9: #{tpu_custom_call.1} parent=5 // pred_check
        _
      $region10: #{tpu_custom_call.1} parent=5 // pred_check_branch
        %339 = sbr.rel (%p336) target = $region12
      $region11: #{tpu_custom_call.1} parent=5 // pred_region
        %s340 = ssub.s32 %s22, 1
        // Predicated region
        $region13: #{tpu_custom_call.1} parent=11 // pred_check
          %p341 = pneg %p69
        $region14: #{tpu_custom_call.1} parent=11 // pred_check_branch
          %343 = sbr.rel (%p341) target = $region16
        $region15: #{tpu_custom_call.1} parent=11 // pred_region
          _
        $region16: #{tpu_custom_call.1} parent=11 // pred_fallthru
          _
        // Predicated region
        $region17: #{tpu_custom_call.1} parent=11 // pred_check
          %p344 = pneg %p90
        $region18: #{tpu_custom_call.1} parent=11 // pred_check_branch
          %346 = sbr.rel (%p344) target = $region20
        $region19: #{tpu_custom_call.1} parent=11 // pred_region
          _
        $region20: #{tpu_custom_call.1} parent=11 // pred_fallthru
          _
        // Predicated region
        $region21: #{tpu_custom_call.1} parent=11 // pred_check
          %p347 = pneg %p111
        $region22: #{tpu_custom_call.1} parent=11 // pred_check_branch
          %349 = sbr.rel (%p347) target = $region24
        $region23: #{tpu_custom_call.1} parent=11 // pred_region
          _
        $region24: #{tpu_custom_call.1} parent=11 // pred_fallthru
          _
        // Predicated region
        $region25: #{tpu_custom_call.1} parent=11 // pred_check
          %p350 = pneg %p132
        $region26: #{tpu_custom_call.1} parent=11 // pred_check_branch
          %352 = sbr.rel (%p350) target = $region28
        $region27: #{tpu_custom_call.1} parent=11 // pred_region
          _
        $region28: #{tpu_custom_call.1} parent=11 // pred_fallthru
          _
        // Predicated region
        $region29: #{tpu_custom_call.1} parent=11 // pred_check
          %p353 = pneg %p153
        $region30: #{tpu_custom_call.1} parent=11 // pred_check_branch
          %355 = sbr.rel (%p353) target = $region32
        $region31: #{tpu_custom_call.1} parent=11 // pred_region
          _
        $region32: #{tpu_custom_call.1} parent=11 // pred_fallthru
          _
        // Predicated region
        $region33: #{tpu_custom_call.1} parent=11 // pred_check
          %p356 = pneg %p174
        $region34: #{tpu_custom_call.1} parent=11 // pred_check_branch
          %358 = sbr.rel (%p356) target = $region36
        $region35: #{tpu_custom_call.1} parent=11 // pred_region
          _
        $region36: #{tpu_custom_call.1} parent=11 // pred_fallthru
          _
        // Predicated region
        $region37: #{tpu_custom_call.1} parent=11 // pred_check
          %p359 = pneg %p195
        $region38: #{tpu_custom_call.1} parent=11 // pred_check_branch
          %361 = sbr.rel (%p359) target = $region40
        $region39: #{tpu_custom_call.1} parent=11 // pred_region
          _
        $region40: #{tpu_custom_call.1} parent=11 // pred_fallthru
          _
        // Predicated region
        $region41: #{tpu_custom_call.1} parent=11 // pred_check
          %p362 = pneg %p216
        $region42: #{tpu_custom_call.1} parent=11 // pred_check_branch
          %364 = sbr.rel (%p362) target = $region44
        $region43: #{tpu_custom_call.1} parent=11 // pred_region
          _
        $region44: #{tpu_custom_call.1} parent=11 // pred_fallthru
          _
        // Predicated region
        $region45: #{tpu_custom_call.1} parent=11 // pred_check
          %p365 = pneg %p237
        $region46: #{tpu_custom_call.1} parent=11 // pred_check_branch
          %367 = sbr.rel (%p365) target = $region48
        $region47: #{tpu_custom_call.1} parent=11 // pred_region
          _
        $region48: #{tpu_custom_call.1} parent=11 // pred_fallthru
          _
        // Predicated region
        $region49: #{tpu_custom_call.1} parent=11 // pred_check
          %p368 = pneg %p258
        $region50: #{tpu_custom_call.1} parent=11 // pred_check_branch
          %370 = sbr.rel (%p368) target = $region52
        $region51: #{tpu_custom_call.1} parent=11 // pred_region
          _
        $region52: #{tpu_custom_call.1} parent=11 // pred_fallthru
          _
        // Predicated region
        $region53: #{tpu_custom_call.1} parent=11 // pred_check
          %p371 = pneg %p279
        $region54: #{tpu_custom_call.1} parent=11 // pred_check_branch
          %373 = sbr.rel (%p371) target = $region56
        $region55: #{tpu_custom_call.1} parent=11 // pred_region
          _
        $region56: #{tpu_custom_call.1} parent=11 // pred_fallthru
          _
        // Predicated region
        $region57: #{tpu_custom_call.1} parent=11 // pred_check
          %p374 = pneg %p300
        $region58: #{tpu_custom_call.1} parent=11 // pred_check_branch
          %376 = sbr.rel (%p374) target = $region60
        $region59: #{tpu_custom_call.1} parent=11 // pred_region
          _
        $region60: #{tpu_custom_call.1} parent=11 // pred_fallthru
          _
      $region12: #{tpu_custom_call.1} parent=5 // pred_fallthru
        _
      %p377 = scmp.lt.s32.totalorder %s22, 2
      // Predicated region
      $region61: #{tpu_custom_call.1} parent=5 // pred_check
        %p378 = pneg %p377
      $region62: #{tpu_custom_call.1} parent=5 // pred_check_branch
        %380 = sbr.rel (%p378) target = $region64
      $region63: #{tpu_custom_call.1} parent=5 // pred_region
        // Predicated region
        $region65: #{tpu_custom_call.1} parent=63 // pred_check
          %p381 = pneg %p42
        $region66: #{tpu_custom_call.1} parent=63 // pred_check_branch
          %383 = sbr.rel (%p381) target = $region68
        $region67: #{tpu_custom_call.1} parent=63 // pred_region
          %p384 = scmp.lt.s32.totalorder %s22, 1
          %s385 = scalar_select %p384, %s22, 1
          %s386 = smul.addr %s385, 8
          %s387 = scalar_lea.vmem %s0, %s386
        $region68: #{tpu_custom_call.1} parent=63 // pred_fallthru
          _
      $region64: #{tpu_custom_call.1} parent=5 // pred_fallthru
        _
      %p388 = scmp.le.s32.totalorder 1, %s22
      %p389 = scmp.lt.s32.totalorder %s22, 3
      %p390 = pnand %p388, %p389
      %p391 = pneg %p390
      // Predicated region
      $region69: #{tpu_custom_call.1} parent=5 // pred_check
        _
      $region70: #{tpu_custom_call.1} parent=5 // pred_check_branch
        %393 = sbr.rel (%p390) target = $region72
      $region71: #{tpu_custom_call.1} parent=5 // pred_region
        %s394 = ssub.s32 %s22, 1
        %p395 = scmp.lt.s32.totalorder %s27, 1
        %s396 = scalar_select %p395, %s27, 1
        %s397 = smul.addr %s396, 8
        %s398 = scalar_lea.vmem %s0, %s397
        %p399 = pneg %p48
        %p400 = pneg %p45
        %p401 = pneg %p69
        %p402 = pneg %p66
        %p403 = pneg %p90
        %p404 = pneg %p87
        %p405 = pneg %p111
        %p406 = pneg %p108
        %p407 = pneg %p132
        %p408 = pneg %p129
        %p409 = pneg %p153
        %p410 = pneg %p150
        %p411 = pneg %p174
        %p412 = pneg %p171
        %p413 = pneg %p195
        %p414 = pneg %p192
        %p415 = pneg %p216
        %p416 = pneg %p213
        %p417 = pneg %p237
        %p418 = pneg %p234
        %p419 = pneg %p258
        %p420 = pneg %p255
        %p421 = pneg %p279
        %p422 = pneg %p276
        %p423 = pneg %p300
        %p424 = pneg %p297
        %p425 = pneg %p326
        %p426 = pneg %p323
        %s427 = sand.u32 %s313, 1
        %s428 = scalar_lea.sflag [#allocation3], %s427
        %s429 = sand.u32 %s313, 1
        %s430 = smul.addr %s429, 8
        %s431 = scalar_lea.vmem [#allocation2], %s430
        %p432 = scmp.lt.s32.totalorder %s27, 1
        %s433 = scalar_select %p432, %s27, 1
        %s434 = smul.addr %s433, 8
        %s435 = scalar_lea.vmem %s0, %s434
        %v436 = vld [vmem:[%s435] sm:$0xff]
        %v437 = vld [vmem:[%s5] sm:$0x1]
        %v438 = vld [vmem:[%s6] sm:$0x1]
        %vm439 = vcmask 261120
        %v440 = vsel %vm439, %v436, 0.0
        %441 = vadd.xlane.f32.xlu0 %v440
        %v442 = vpop.xlane.xlu0 %441
        %v443 = vrcp.pop 32.0
        %v444 = vmul.f32 32.0, %v443
        %v445 = vsub.f32 1.0, %v444
        %v446 = vmul.f32 %v443, %v445
        %v447 = vadd.f32 %v443, %v446
        %vm448 = vweird.f32 %v443
        %v449 = vsel %vm448, %v443, %v447
        %v450 = vmul.f32 %v442, %v449
        %v451 = vsub.f32 %v436, %v450
        %v452 = vmul.f32 %v451, %v451
        %v453 = vsel %vm439, %v452, 0.0
        %454 = vadd.xlane.f32.xlu0 %v453
        %v455 = vpop.xlane.xlu0 %454
        %v456 = vmul.f32 %v455, %v449
        %v457 = vadd.f32 %v456, 1e-05
        %v458 = vrsqrt.pop %v457
        %v459 = vmul.f32 %v458, %v457
        %v460 = vmul.f32 %v459, %v458
        %v461 = vmul.f32 0.5, %v460
        %v462 = vsub.f32 1.5, %v461
        %v463 = vmul.f32 %v458, %v462
        %vm464 = vweird.f32 %v457
        %vm465 = vweird.f32 %v458
        %vm466 = vmor %vm464, %vm465
        %v467 = vsel %vm466, %v458, %v463
        %v468 = vmul.f32 %v451, %v467
        %v470 = vperm.slane %v437, 0
        %v472 = vmul.f32 %v468, %v470
        %v474 = vperm.slane %v438, 0
        %v476 = vadd.f32 %v472, %v474
        %v477 = vld [vmem:[%s1] sm:$0xff]
        %v478 = vld [vmem:[%s1 + $0x8] sm:$0xff]
        %v479 = vld [vmem:[%s1 + $0x10] sm:$0xff]
        %v480 = vld [vmem:[%s1 + $0x18] sm:$0xff]
        %v481 = vld [vmem:[%s1 + $0x20] sm:$0xff]
        %v482 = vld [vmem:[%s1 + $0x28] sm:$0xff]
        %v483 = vld [vmem:[%s1 + $0x30] sm:$0xff]
        %v484 = vld [vmem:[%s1 + $0x38] sm:$0xff]
        %v485 = vld [vmem:[%s1 + $0x40] sm:$0xff]
        %v486 = vld [vmem:[%s1 + $0x48] sm:$0xff]
        %v487 = vld [vmem:[%s1 + $0x50] sm:$0xff]
        %v488 = vld [vmem:[%s1 + $0x58] sm:$0xff]
        %v489 = vld [vmem:[%s1 + $0x60] sm:$0xff]
        %v490 = vld [vmem:[%s1 + $0x68] sm:$0xff]
        %v491 = vld [vmem:[%s1 + $0x70] sm:$0xff]
        %v492 = vld [vmem:[%s1 + $0x78] sm:$0xff]
        %v493 = vld [vmem:[%s2] sm:$0x1]
        %v494 = vld [vmem:[%s2 + $0x1] sm:$0x1]
        %v495 = vld [vmem:[%s2 + $0x2] sm:$0x1]
        %v496 = vld [vmem:[%s2 + $0x3] sm:$0x1]
        %v501 = vperm.slane %v493, 0
        %v502 = vperm.slane %v494, 0
        %v503 = vperm.slane %v495, 0
        %v504 = vperm.slane %v496, 0
        %v510 = vsel %vm439, %v476, 0
        %512 = vmatpush.msra.mxu0 0.0
        %513 = vmatpush.msra.mxu0 0.0
        %514 = vmatpush.msra.mxu0 0.0
        %515 = vmatpush.msra.mxu0 0.0
        %516 = vmatpush.msra.mxu0 0.0
        %517 = vmatpush.msra.mxu0 0.0
        %518 = vmatpush.msra.mxu0 0.0
        %519 = vmatpush.msra.mxu0 0.0
        %520 = vmatpush.msra.mxu0 0.0
        %521 = vmatpush.msra.mxu0 0.0
        %522 = vmatpush.msra.mxu0 0.0
        %523 = vmatpush.msra.mxu0 0.0
        %524 = vmatpush.msra.mxu0 %v480
        %525 = vmatpush.msra.mxu0 %v479
        %526 = vmatpush.msra.mxu0 %v478
        %527 = vmatpush.msra.mxu0 %v477
        %528 = vmatmul.f32.gmra.mxu0 %v510
        %v529 = vpop.f32.mrf.mxu0
        %v530 = vadd.f32 %v501, %v529
        %531 = vdwg.mxu0
        %532 = vmatpush.msra.mxu0 0.0
        %533 = vmatpush.msra.mxu0 0.0
        %534 = vmatpush.msra.mxu0 0.0
        %535 = vmatpush.msra.mxu0 0.0
        %536 = vmatpush.msra.mxu0 0.0
        %537 = vmatpush.msra.mxu0 0.0
        %538 = vmatpush.msra.mxu0 0.0
        %539 = vmatpush.msra.mxu0 0.0
        %540 = vmatpush.msra.mxu0 0.0
        %541 = vmatpush.msra.mxu0 0.0
        %542 = vmatpush.msra.mxu0 0.0
        %543 = vmatpush.msra.mxu0 0.0
        %544 = vmatpush.msra.mxu0 %v484
        %545 = vmatpush.msra.mxu0 %v483
        %546 = vmatpush.msra.mxu0 %v482
        %547 = vmatpush.msra.mxu0 %v481
        %548 = vmatmul.f32.gmra.mxu0 %v510
        %v549 = vpop.f32.mrf.mxu0
        %v550 = vadd.f32 %v502, %v549
        %551 = vdwg.mxu0
        %552 = vmatpush.msra.mxu0 0.0
        %553 = vmatpush.msra.mxu0 0.0
        %554 = vmatpush.msra.mxu0 0.0
        %555 = vmatpush.msra.mxu0 0.0
        %556 = vmatpush.msra.mxu0 0.0
        %557 = vmatpush.msra.mxu0 0.0
        %558 = vmatpush.msra.mxu0 0.0
        %559 = vmatpush.msra.mxu0 0.0
        %560 = vmatpush.msra.mxu0 0.0
        %561 = vmatpush.msra.mxu0 0.0
        %562 = vmatpush.msra.mxu0 0.0
        %563 = vmatpush.msra.mxu0 0.0
        %564 = vmatpush.msra.mxu0 %v488
        %565 = vmatpush.msra.mxu0 %v487
        %566 = vmatpush.msra.mxu0 %v486
        %567 = vmatpush.msra.mxu0 %v485
        %568 = vmatmul.f32.gmra.mxu0 %v510
        %v569 = vpop.f32.mrf.mxu0
        %v570 = vadd.f32 %v503, %v569
        %571 = vdwg.mxu0
        %572 = vmatpush.msra.mxu0 0.0
        %573 = vmatpush.msra.mxu0 0.0
        %574 = vmatpush.msra.mxu0 0.0
        %575 = vmatpush.msra.mxu0 0.0
        %576 = vmatpush.msra.mxu0 0.0
        %577 = vmatpush.msra.mxu0 0.0
        %578 = vmatpush.msra.mxu0 0.0
        %579 = vmatpush.msra.mxu0 0.0
        %580 = vmatpush.msra.mxu0 0.0
        %581 = vmatpush.msra.mxu0 0.0
        %582 = vmatpush.msra.mxu0 0.0
        %583 = vmatpush.msra.mxu0 0.0
        %584 = vmatpush.msra.mxu0 %v492
        %585 = vmatpush.msra.mxu0 %v491
        %586 = vmatpush.msra.mxu0 %v490
        %587 = vmatpush.msra.mxu0 %v489
        %588 = vmatmul.f32.gmra.mxu0 %v510
        %v589 = vpop.f32.mrf.mxu0
        %v590 = vadd.f32 %v504, %v589
        %591 = vdwg.mxu0
        %v592 = vmul.f32 %v530, 0.35355338
        %v593 = vmul.f32 %v550, 0.35355338
        %v594 = vmul.f32 %v570, 0.35355338
        %v595 = vmul.f32 %v590, 0.35355338
        %597 = vrot.lane.b32.xlu0 %v530, 120
        %v598 = vpop.permute.xlu0 %597
        %vm599 = vcmask 64512
        %v601 = vsel %vm599, %v592, 0
        %v603 = vsel %vm599, %v598, 0
        %605 = vmatpush.xpose.msra.mxu0 0.0
        %606 = vmatpush.xpose.msra.mxu0 0.0
        %607 = vmatpush.xpose.msra.mxu0 0.0
        %608 = vmatpush.xpose.msra.mxu0 0.0
        %609 = vmatpush.xpose.msra.mxu0 0.0
        %610 = vmatpush.xpose.msra.mxu0 0.0
        %611 = vmatpush.xpose.msra.mxu0 0.0
        %612 = vmatpush.xpose.msra.mxu0 0.0
        %613 = vmatpush.xpose.msra.mxu0 0.0
        %614 = vmatpush.xpose.msra.mxu0 0.0
        %615 = vmatpush.xpose.msra.mxu0 0.0
        %616 = vmatpush.xpose.msra.mxu0 0.0
        %617 = vmatpush.xpose.msra.mxu0 0.0
        %618 = vmatpush.xpose.msra.mxu0 0.0
        %619 = vmatpush.xpose.msra.mxu0 0.0
        %620 = vmatpush.xpose.msra.mxu0 %v603
        %621 = vmatmul.f32.gmra.mxu0 %v601
        %v622 = vpop.f32.mrf.mxu0
        %v623 = vadd.f32 0.0, %v622
        %624 = vdwg.mxu0
        %626 = vrot.lane.b32.xlu0 %v550, 120
        %v627 = vpop.permute.xlu0 %626
        %v629 = vsel %vm599, %v593, 0
        %v631 = vsel %vm599, %v627, 0
        %633 = vmatpush.xpose.msra.mxu0 0.0
        %634 = vmatpush.xpose.msra.mxu0 0.0
        %635 = vmatpush.xpose.msra.mxu0 0.0
        %636 = vmatpush.xpose.msra.mxu0 0.0
        %637 = vmatpush.xpose.msra.mxu0 0.0
        %638 = vmatpush.xpose.msra.mxu0 0.0
        %639 = vmatpush.xpose.msra.mxu0 0.0
        %640 = vmatpush.xpose.msra.mxu0 0.0
        %641 = vmatpush.xpose.msra.mxu0 0.0
        %642 = vmatpush.xpose.msra.mxu0 0.0
        %643 = vmatpush.xpose.msra.mxu0 0.0
        %644 = vmatpush.xpose.msra.mxu0 0.0
        %645 = vmatpush.xpose.msra.mxu0 0.0
        %646 = vmatpush.xpose.msra.mxu0 0.0
        %647 = vmatpush.xpose.msra.mxu0 0.0
        %648 = vmatpush.xpose.msra.mxu0 %v631
        %649 = vmatmul.f32.gmra.mxu0 %v629
        %v650 = vpop.f32.mrf.mxu0
        %v651 = vadd.f32 0.0, %v650
        %652 = vdwg.mxu0
        %654 = vrot.lane.b32.xlu0 %v570, 120
        %v655 = vpop.permute.xlu0 %654
        %v657 = vsel %vm599, %v594, 0
        %v659 = vsel %vm599, %v655, 0
        %661 = vmatpush.xpose.msra.mxu0 0.0
        %662 = vmatpush.xpose.msra.mxu0 0.0
        %663 = vmatpush.xpose.msra.mxu0 0.0
        %664 = vmatpush.xpose.msra.mxu0 0.0
        %665 = vmatpush.xpose.msra.mxu0 0.0
        %666 = vmatpush.xpose.msra.mxu0 0.0
        %667 = vmatpush.xpose.msra.mxu0 0.0
        %668 = vmatpush.xpose.msra.mxu0 0.0
        %669 = vmatpush.xpose.msra.mxu0 0.0
        %670 = vmatpush.xpose.msra.mxu0 0.0
        %671 = vmatpush.xpose.msra.mxu0 0.0
        %672 = vmatpush.xpose.msra.mxu0 0.0
        %673 = vmatpush.xpose.msra.mxu0 0.0
        %674 = vmatpush.xpose.msra.mxu0 0.0
        %675 = vmatpush.xpose.msra.mxu0 0.0
        %676 = vmatpush.xpose.msra.mxu0 %v659
        %677 = vmatmul.f32.gmra.mxu0 %v657
        %v678 = vpop.f32.mrf.mxu0
        %v679 = vadd.f32 0.0, %v678
        %680 = vdwg.mxu0
        %682 = vrot.lane.b32.xlu0 %v590, 120
        %v683 = vpop.permute.xlu0 %682
        %v685 = vsel %vm599, %v595, 0
        %v687 = vsel %vm599, %v683, 0
        %689 = vmatpush.xpose.msra.mxu0 0.0
        %690 = vmatpush.xpose.msra.mxu0 0.0
        %691 = vmatpush.xpose.msra.mxu0 0.0
        %692 = vmatpush.xpose.msra.mxu0 0.0
        %693 = vmatpush.xpose.msra.mxu0 0.0
        %694 = vmatpush.xpose.msra.mxu0 0.0
        %695 = vmatpush.xpose.msra.mxu0 0.0
        %696 = vmatpush.xpose.msra.mxu0 0.0
        %697 = vmatpush.xpose.msra.mxu0 0.0
        %698 = vmatpush.xpose.msra.mxu0 0.0
        %699 = vmatpush.xpose.msra.mxu0 0.0
        %700 = vmatpush.xpose.msra.mxu0 0.0
        %701 = vmatpush.xpose.msra.mxu0 0.0
        %702 = vmatpush.xpose.msra.mxu0 0.0
        %703 = vmatpush.xpose.msra.mxu0 0.0
        %704 = vmatpush.xpose.msra.mxu0 %v687
        %705 = vmatmul.f32.gmra.mxu0 %v685
        %v706 = vpop.f32.mrf.mxu0
        %v707 = vadd.f32 0.0, %v706
        %708 = vdwg.mxu0
        %v709 = vsel %vm599, %v623, -inf
        %710 = vmax.xlane.f32.xlu0 %v709
        %v711 = vpop.xlane.xlu0 %710
        %v712 = vsel %vm599, %v651, -inf
        %713 = vmax.xlane.f32.xlu0 %v712
        %v714 = vpop.xlane.xlu0 %713
        %v715 = vsel %vm599, %v679, -inf
        %716 = vmax.xlane.f32.xlu0 %v715
        %v717 = vpop.xlane.xlu0 %716
        %v718 = vsel %vm599, %v707, -inf
        %719 = vmax.xlane.f32.xlu0 %v718
        %v720 = vpop.xlane.xlu0 %719
        %v721 = vsub.f32 %v623, %v711
        %v722 = vsub.f32 %v651, %v714
        %v723 = vsub.f32 %v679, %v717
        %v724 = vsub.f32 %v707, %v720
        %v725 = vmul.f32 %v721, 1.442695
        %v726 = vpow.pop %v725
        %v727 = vmul.f32 %v722, 1.442695
        %v728 = vpow.pop %v727
        %v729 = vmul.f32 %v723, 1.442695
        %v730 = vpow.pop %v729
        %v731 = vmul.f32 %v724, 1.442695
        %v732 = vpow.pop %v731
        %v733 = vsel %vm599, %v726, 0.0
        %734 = vadd.xlane.f32.xlu0 %v733
        %v735 = vpop.xlane.xlu0 %734
        %v736 = vsel %vm599, %v728, 0.0
        %737 = vadd.xlane.f32.xlu0 %v736
        %v738 = vpop.xlane.xlu0 %737
        %v739 = vsel %vm599, %v730, 0.0
        %740 = vadd.xlane.f32.xlu0 %v739
        %v741 = vpop.xlane.xlu0 %740
        %v742 = vsel %vm599, %v732, 0.0
        %743 = vadd.xlane.f32.xlu0 %v742
        %v744 = vpop.xlane.xlu0 %743
        %v745 = vrcp.pop %v735
        %v746 = vrcp.pop %v738
        %v747 = vrcp.pop %v741
        %v748 = vrcp.pop %v744
        %v749 = vmul.f32 %v726, %v745
        %v750 = vmul.f32 %v728, %v746
        %v751 = vmul.f32 %v730, %v747
        %v752 = vmul.f32 %v732, %v748
        %753 = vrot.lane.b32.xlu0 %v530, 112
        %v754 = vpop.permute.xlu0 %753
        %v757 = vsel %vm599, %v749, 0
        %759 = vmatpush.msra.mxu0 0.0
        %760 = vmatpush.msra.mxu0 0.0
        %761 = vmatpush.msra.mxu0 0.0
        %762 = vmatpush.msra.mxu0 0.0
        %763 = vmatpush.msra.mxu0 0.0
        %764 = vmatpush.msra.mxu0 0.0
        %765 = vmatpush.msra.mxu0 0.0
        %766 = vmatpush.msra.mxu0 0.0
        %767 = vmatpush.msra.mxu0 0.0
        %768 = vmatpush.msra.mxu0 0.0
        %769 = vmatpush.msra.mxu0 0.0
        %770 = vmatpush.msra.mxu0 0.0
        %771 = vmatpush.msra.mxu0 0.0
        %772 = vmatpush.msra.mxu0 0.0
        %773 = vmatpush.msra.mxu0 0.0
        %774 = vmatpush.msra.mxu0 %v754
        %775 = vmatmul.f32.gmra.mxu0 %v757
        %v776 = vpop.f32.mrf.mxu0
        %v777 = vadd.f32 0.0, %v776
        %778 = vdwg.mxu0
        %779 = vrot.lane.b32.xlu0 %v550, 112
        %v780 = vpop.permute.xlu0 %779
        %v783 = vsel %vm599, %v750, 0
        %785 = vmatpush.msra.mxu0 0.0
        %786 = vmatpush.msra.mxu0 0.0
        %787 = vmatpush.msra.mxu0 0.0
        %788 = vmatpush.msra.mxu0 0.0
        %789 = vmatpush.msra.mxu0 0.0
        %790 = vmatpush.msra.mxu0 0.0
        %791 = vmatpush.msra.mxu0 0.0
        %792 = vmatpush.msra.mxu0 0.0
        %793 = vmatpush.msra.mxu0 0.0
        %794 = vmatpush.msra.mxu0 0.0
        %795 = vmatpush.msra.mxu0 0.0
        %796 = vmatpush.msra.mxu0 0.0
        %797 = vmatpush.msra.mxu0 0.0
        %798 = vmatpush.msra.mxu0 0.0
        %799 = vmatpush.msra.mxu0 0.0
        %800 = vmatpush.msra.mxu0 %v780
        %801 = vmatmul.f32.gmra.mxu0 %v783
        %v802 = vpop.f32.mrf.mxu0
        %v803 = vadd.f32 0.0, %v802
        %804 = vdwg.mxu0
        %805 = vrot.lane.b32.xlu0 %v570, 112
        %v806 = vpop.permute.xlu0 %805
        %v809 = vsel %vm599, %v751, 0
        %811 = vmatpush.msra.mxu0 0.0
        %812 = vmatpush.msra.mxu0 0.0
        %813 = vmatpush.msra.mxu0 0.0
        %814 = vmatpush.msra.mxu0 0.0
        %815 = vmatpush.msra.mxu0 0.0
        %816 = vmatpush.msra.mxu0 0.0
        %817 = vmatpush.msra.mxu0 0.0
        %818 = vmatpush.msra.mxu0 0.0
        %819 = vmatpush.msra.mxu0 0.0
        %820 = vmatpush.msra.mxu0 0.0
        %821 = vmatpush.msra.mxu0 0.0
        %822 = vmatpush.msra.mxu0 0.0
        %823 = vmatpush.msra.mxu0 0.0
        %824 = vmatpush.msra.mxu0 0.0
        %825 = vmatpush.msra.mxu0 0.0
        %826 = vmatpush.msra.mxu0 %v806
        %827 = vmatmul.f32.gmra.mxu0 %v809
        %v828 = vpop.f32.mrf.mxu0
        %v829 = vadd.f32 0.0, %v828
        %830 = vdwg.mxu0
        %831 = vrot.lane.b32.xlu0 %v590, 112
        %v832 = vpop.permute.xlu0 %831
        %v835 = vsel %vm599, %v752, 0
        %837 = vmatpush.msra.mxu0 0.0
        %838 = vmatpush.msra.mxu0 0.0
        %839 = vmatpush.msra.mxu0 0.0
        %840 = vmatpush.msra.mxu0 0.0
        %841 = vmatpush.msra.mxu0 0.0
        %842 = vmatpush.msra.mxu0 0.0
        %843 = vmatpush.msra.mxu0 0.0
        %844 = vmatpush.msra.mxu0 0.0
        %845 = vmatpush.msra.mxu0 0.0
        %846 = vmatpush.msra.mxu0 0.0
        %847 = vmatpush.msra.mxu0 0.0
        %848 = vmatpush.msra.mxu0 0.0
        %849 = vmatpush.msra.mxu0 0.0
        %850 = vmatpush.msra.mxu0 0.0
        %851 = vmatpush.msra.mxu0 0.0
        %852 = vmatpush.msra.mxu0 %v832
        %853 = vmatmul.f32.gmra.mxu0 %v835
        %v854 = vpop.f32.mrf.mxu0
        %v855 = vadd.f32 0.0, %v854
        %856 = vdwg.mxu0
        %v857 = vld [vmem:[%s3] sm:$0xff]
        %v858 = vld [vmem:[%s3 + $0x8] sm:$0xff]
        %v859 = vld [vmem:[%s3 + $0x10] sm:$0xff]
        %v860 = vld [vmem:[%s3 + $0x18] sm:$0xff]
        %v862 = vsel %vm599, %v777, 0
        %864 = vmatpush.msra.mxu0 0.0
        %865 = vmatpush.msra.mxu0 0.0
        %866 = vmatpush.msra.mxu0 0.0
        %867 = vmatpush.msra.mxu0 0.0
        %868 = vmatpush.msra.mxu0 0.0
        %869 = vmatpush.msra.mxu0 0.0
        %870 = vmatpush.msra.mxu0 0.0
        %871 = vmatpush.msra.mxu0 0.0
        %872 = vmatpush.msra.mxu0 0.0
        %873 = vmatpush.msra.mxu0 0.0
        %874 = vmatpush.msra.mxu0 0.0
        %875 = vmatpush.msra.mxu0 0.0
        %876 = vmatpush.msra.mxu0 0.0
        %877 = vmatpush.msra.mxu0 0.0
        %878 = vmatpush.msra.mxu0 0.0
        %879 = vmatpush.msra.mxu0 %v857
        %880 = vmatmul.f32.gmra.mxu0 %v862
        %v881 = vpop.f32.mrf.mxu0
        %v882 = vadd.f32 0.0, %v881
        %883 = vdwg.mxu0
        %v885 = vsel %vm599, %v803, 0
        %887 = vmatpush.msra.mxu0 0.0
        %888 = vmatpush.msra.mxu0 0.0
        %889 = vmatpush.msra.mxu0 0.0
        %890 = vmatpush.msra.mxu0 0.0
        %891 = vmatpush.msra.mxu0 0.0
        %892 = vmatpush.msra.mxu0 0.0
        %893 = vmatpush.msra.mxu0 0.0
        %894 = vmatpush.msra.mxu0 0.0
        %895 = vmatpush.msra.mxu0 0.0
        %896 = vmatpush.msra.mxu0 0.0
        %897 = vmatpush.msra.mxu0 0.0
        %898 = vmatpush.msra.mxu0 0.0
        %899 = vmatpush.msra.mxu0 0.0
        %900 = vmatpush.msra.mxu0 0.0
        %901 = vmatpush.msra.mxu0 0.0
        %902 = vmatpush.msra.mxu0 %v858
        %903 = vmatmul.f32.gmra.mxu0 %v885
        %v904 = vpop.f32.mrf.mxu0
        %v905 = vadd.f32 0.0, %v904
        %906 = vdwg.mxu0
        %v908 = vsel %vm599, %v829, 0
        %910 = vmatpush.msra.mxu0 0.0
        %911 = vmatpush.msra.mxu0 0.0
        %912 = vmatpush.msra.mxu0 0.0
        %913 = vmatpush.msra.mxu0 0.0
        %914 = vmatpush.msra.mxu0 0.0
        %915 = vmatpush.msra.mxu0 0.0
        %916 = vmatpush.msra.mxu0 0.0
        %917 = vmatpush.msra.mxu0 0.0
        %918 = vmatpush.msra.mxu0 0.0
        %919 = vmatpush.msra.mxu0 0.0
        %920 = vmatpush.msra.mxu0 0.0
        %921 = vmatpush.msra.mxu0 0.0
        %922 = vmatpush.msra.mxu0 0.0
        %923 = vmatpush.msra.mxu0 0.0
        %924 = vmatpush.msra.mxu0 0.0
        %925 = vmatpush.msra.mxu0 %v859
        %926 = vmatmul.f32.gmra.mxu0 %v908
        %v927 = vpop.f32.mrf.mxu0
        %v928 = vadd.f32 0.0, %v927
        %929 = vdwg.mxu0
        %v931 = vsel %vm599, %v855, 0
        %933 = vmatpush.msra.mxu0 0.0
        %934 = vmatpush.msra.mxu0 0.0
        %935 = vmatpush.msra.mxu0 0.0
        %936 = vmatpush.msra.mxu0 0.0
        %937 = vmatpush.msra.mxu0 0.0
        %938 = vmatpush.msra.mxu0 0.0
        %939 = vmatpush.msra.mxu0 0.0
        %940 = vmatpush.msra.mxu0 0.0
        %941 = vmatpush.msra.mxu0 0.0
        %942 = vmatpush.msra.mxu0 0.0
        %943 = vmatpush.msra.mxu0 0.0
        %944 = vmatpush.msra.mxu0 0.0
        %945 = vmatpush.msra.mxu0 0.0
        %946 = vmatpush.msra.mxu0 0.0
        %947 = vmatpush.msra.mxu0 0.0
        %948 = vmatpush.msra.mxu0 %v860
        %949 = vmatmul.f32.gmra.mxu0 %v931
        %v950 = vpop.f32.mrf.mxu0
        %v951 = vadd.f32 0.0, %v950
        %952 = vdwg.mxu0
        %v953 = vsel %vm439, %v882, 0.0
        %v954 = vsel %vm439, %v905, 0.0
        %v955 = vadd.f32 %v953, %v954
        %v956 = vsel %vm439, %v928, 0.0
        %v957 = vadd.f32 %v955, %v956
        %v958 = vsel %vm439, %v951, 0.0
        %v959 = vadd.f32 %v957, %v958
        %v960 = vld [vmem:[%s4] sm:$0x1]
        %v962 = vperm.slane %v960, 0
        %v964 = vadd.f32 %v959, %v962
        %v965 = vadd.f32 %v436, %v964
        %v966 = vld [vmem:[%s11] sm:$0x1]
        %v967 = vld [vmem:[%s12] sm:$0x1]
        %v968 = vsel %vm439, %v965, 0.0
        %969 = vadd.xlane.f32.xlu0 %v968
        %v970 = vpop.xlane.xlu0 %969
        %v971 = vmul.f32 %v970, %v449
        %v972 = vsub.f32 %v965, %v971
        %v973 = vmul.f32 %v972, %v972
        %v974 = vsel %vm439, %v973, 0.0
        %975 = vadd.xlane.f32.xlu0 %v974
        %v976 = vpop.xlane.xlu0 %975
        %v977 = vmul.f32 %v976, %v449
        %v978 = vadd.f32 %v977, 1e-05
        %v979 = vrsqrt.pop %v978
        %v980 = vmul.f32 %v979, %v978
        %v981 = vmul.f32 %v980, %v979
        %v982 = vmul.f32 0.5, %v981
        %v983 = vsub.f32 1.5, %v982
        %v984 = vmul.f32 %v979, %v983
        %vm985 = vweird.f32 %v978
        %vm986 = vweird.f32 %v979
        %vm987 = vmor %vm985, %vm986
        %v988 = vsel %vm987, %v979, %v984
        %v989 = vmul.f32 %v972, %v988
        %v991 = vperm.slane %v966, 0
        %v993 = vmul.f32 %v989, %v991
        %v995 = vperm.slane %v967, 0
        %v997 = vadd.f32 %v993, %v995
        %v998 = vld [vmem:[%s7] sm:$0xff]
        %v999 = vld [vmem:[%s7 + $0x8] sm:$0xff]
        %v1000 = vld [vmem:[%s7 + $0x10] sm:$0xff]
        %v1001 = vld [vmem:[%s7 + $0x18] sm:$0xff]
        %v1002 = vld [vmem:[%s8] sm:$0x1]
        %v1004 = vperm.slane %v1002, 0
        %v1007 = vsel %vm439, %v997, 0
        %1009 = vmatpush.msra.mxu0 0.0
        %1010 = vmatpush.msra.mxu0 0.0
        %1011 = vmatpush.msra.mxu0 0.0
        %1012 = vmatpush.msra.mxu0 0.0
        %1013 = vmatpush.msra.mxu0 0.0
        %1014 = vmatpush.msra.mxu0 0.0
        %1015 = vmatpush.msra.mxu0 0.0
        %1016 = vmatpush.msra.mxu0 0.0
        %1017 = vmatpush.msra.mxu0 0.0
        %1018 = vmatpush.msra.mxu0 0.0
        %1019 = vmatpush.msra.mxu0 0.0
        %1020 = vmatpush.msra.mxu0 0.0
        %1021 = vmatpush.msra.mxu0 %v1001
        %1022 = vmatpush.msra.mxu0 %v1000
        %1023 = vmatpush.msra.mxu0 %v999
        %1024 = vmatpush.msra.mxu0 %v998
        %1025 = vmatmul.f32.gmra.mxu0 %v1007
        %v1026 = vpop.f32.mrf.mxu0
        %v1027 = vadd.f32 %v1004, %v1026
        %1028 = vdwg.mxu0
        %v1029 = vmul.f32 %v1027, %v1027
        %v1030 = vmul.f32 %v1027, %v1029
        %v1031 = vmul.f32 %v1030, 0.044715
        %v1032 = vadd.f32 %v1027, %v1031
        %v1033 = vmul.f32 %v1032, 0.7978846
        %v1034 = vtanh.pop %v1033
        %v1035 = vadd.f32 %v1034, 1.0
        %v1036 = vmul.f32 %v1035, 0.5
        %v1037 = vmul.f32 %v1027, %v1036
        %v1038 = vld [vmem:[%s9] sm:$0xff]
        %v1039 = vld [vmem:[%s9 + $0x8] sm:$0xff]
        %v1040 = vld [vmem:[%s9 + $0x10] sm:$0xff]
        %v1041 = vld [vmem:[%s9 + $0x18] sm:$0xff]
        %v1042 = vld [vmem:[%s9 + $0x20] sm:$0xff]
        %v1043 = vld [vmem:[%s9 + $0x28] sm:$0xff]
        %v1044 = vld [vmem:[%s9 + $0x30] sm:$0xff]
        %v1045 = vld [vmem:[%s9 + $0x38] sm:$0xff]
        %v1046 = vld [vmem:[%s10] sm:$0x1]
        %v1048 = vperm.slane %v1046, 0
        %vm1050 = vcmask 523264
        %v1052 = vsel %vm1050, %v1037, 0
        %1054 = vmatpush.msra.mxu0 0.0
        %1055 = vmatpush.msra.mxu0 0.0
        %1056 = vmatpush.msra.mxu0 0.0
        %1057 = vmatpush.msra.mxu0 0.0
        %1058 = vmatpush.msra.mxu0 0.0
        %1059 = vmatpush.msra.mxu0 0.0
        %1060 = vmatpush.msra.mxu0 0.0
        %1061 = vmatpush.msra.mxu0 0.0
        %1062 = vmatpush.msra.mxu0 %v1045
        %1063 = vmatpush.msra.mxu0 %v1044
        %1064 = vmatpush.msra.mxu0 %v1043
        %1065 = vmatpush.msra.mxu0 %v1042
        %1066 = vmatpush.msra.mxu0 %v1041
        %1067 = vmatpush.msra.mxu0 %v1040
        %1068 = vmatpush.msra.mxu0 %v1039
        %1069 = vmatpush.msra.mxu0 %v1038
        %1070 = vmatmul.f32.gmra.mxu0 %v1052
        %v1071 = vpop.f32.mrf.mxu0
        %v1072 = vadd.f32 %v1048, %v1071
        %1073 = vdwg.mxu0
        %v1074 = vadd.f32 %v965, %v1072
        %1075 = vst.msk [vmem:[%s431] sm:$0xff] %vm439, %v1074
        %s1076 = sand.u32 %s313, 1
        %s1077 = scalar_lea.sflag [#allocation3], %s1076
        %s1078 = sand.u32 %s313, 1
        %s1079 = smul.addr %s1078, 8
        %s1080 = scalar_lea.vmem [#allocation2], %s1079
        // Predicated region
        $region73: #{tpu_custom_call.1} parent=71 // pred_check
          %p1081 = pneg %p323
        $region74: #{tpu_custom_call.1} parent=71 // pred_check_branch
          %1083 = sbr.rel (%p1081) target = $region76
        $region75: #{tpu_custom_call.1} parent=71 // pred_region
          %1085 = vsyncadd %s1077, 0
          %s1086 = smul.addr %s27, 8
          %s1087 = scalar_lea.hbm %s13, %s1086
          %s1089 = sshll.u32 %s1080, 4
          %s1090 = int_to_ptr.vmem [resolvable:$true] %s1089
          %s1091 = sshll.u32 %s1087, 4
          %s1092 = int_to_ptr.hbm [resolvable:$true] %s1091
          %1094 = dma.vmem_to_hbm [thread:$0]  %s1090, 128, %s1092, %s1077
        $region76: #{tpu_custom_call.1} parent=71 // pred_fallthru
          _
      $region72: #{tpu_custom_call.1} parent=5 // pred_fallthru
        _
      %p1095 = scmp.le.s32.totalorder 2, %s22
      // Predicated region
      $region77: #{tpu_custom_call.1} parent=5 // pred_check
        %p1096 = pneg %p1095
      $region78: #{tpu_custom_call.1} parent=5 // pred_check_branch
        %1098 = sbr.rel (%p1096) target = $region80
      $region79: #{tpu_custom_call.1} parent=5 // pred_region
        %s1099 = ssub.s32 %s22, 2
        // Predicated region
        $region81: #{tpu_custom_call.1} parent=79 // pred_check
          %p1100 = pneg %p329
        $region82: #{tpu_custom_call.1} parent=79 // pred_check_branch
          %1102 = sbr.rel (%p1100) target = $region84
        $region83: #{tpu_custom_call.1} parent=79 // pred_region
          %s1103 = sand.u32 %s314, 1
          %s1104 = scalar_lea.sflag [#allocation3], %s1103
          %s1105 = sand.u32 %s314, 1
          %s1106 = smul.addr %s1105, 8
          %s1107 = scalar_lea.vmem [#allocation2], %s1106
          %1109 = dma.done %s1104, 128
        $region84: #{tpu_custom_call.1} parent=79 // pred_fallthru
          _
      $region80: #{tpu_custom_call.1} parent=5 // pred_fallthru
        _
    $region6: #{tpu_custom_call.1} parent=1 // loop_footer
      %s26 = sadd.s32 1, %s22
    $region7: #{tpu_custom_call.1} parent=1 // loop_footer_branch
      %21 = sbr.rel target = $region3
    $region8: #{tpu_custom_call.1} parent=1 // loop_exit
      _
    %1110 = vsyncpa [#allocation3], 1
    %s1111 = scalar_lea.sflag [#allocation3], 1
    %1112 = vsyncpa %s1111, 1

// kernel: tpu_custom_call.1
$region0: #{tpu_custom_call.1}
  #allocation0 [shape = 'u32[]', space=smem, size = 0x4, offset = 0x4, fixed_abs, tag = 'smem constant byte address 0x4 - core index']
  #allocation1 [shape = 'u32[72,128]{1,0:T(1,128)}', space=vmem, size = 0x9000, scoped, tag = 'internal scratch']
  %s0 = inlined_call_operand.vmem [shape: f32[2,8,32], index: 0, kind: input, shape index: {}]
  %s1 = inlined_call_operand.vmem [shape: f32[4,32,24], index: 1, kind: input, shape index: {}]
  %s2 = inlined_call_operand.vmem [shape: f32[4,1,24], index: 2, kind: input, shape index: {}]
  %s3 = inlined_call_operand.vmem [shape: f32[4,8,32], index: 3, kind: input, shape index: {}]
  %s4 = inlined_call_operand.vmem [shape: f32[1,32], index: 4, kind: input, shape index: {}]
  %s5 = inlined_call_operand.vmem [shape: f32[1,32], index: 5, kind: input, shape index: {}]
  %s6 = inlined_call_operand.vmem [shape: f32[1,32], index: 6, kind: input, shape index: {}]
  %s7 = inlined_call_operand.vmem [shape: f32[32,64], index: 7, kind: input, shape index: {}]
  %s8 = inlined_call_operand.vmem [shape: f32[1,64], index: 8, kind: input, shape index: {}]
  %s9 = inlined_call_operand.vmem [shape: f32[64,32], index: 9, kind: input, shape index: {}]
  %s10 = inlined_call_operand.vmem [shape: f32[1,32], index: 10, kind: input, shape index: {}]
  %s11 = inlined_call_operand.vmem [shape: f32[1,32], index: 11, kind: input, shape index: {}]
  %s12 = inlined_call_operand.vmem [shape: f32[1,32], index: 12, kind: input, shape index: {}]
  %s13 = inlined_call_operand.hbm [shape: f32[2,8,32], index: 13, kind: output, shape index: {}]
  %s14 = sld [smem:[#allocation0]]
  $region85: #{tpu_custom_call.1} parent=0
    _
  %s16 = ssub.s32 1, %s14
  %s17 = scalar_select 0, %s16, %s14
  $region1: #{tpu_custom_call.1} parent=0
    #allocation2 [shape = 'u8[8192]{0}', space=vmem, size = 0x2000, scoped, tag = 'output window, operand 0']
    #allocation3 [shape = 's32[2]{0}', space=sflag, size = 0x8, scoped, tag = 'scoped memory for tpu_custom_call.1']
    %18 = vsyncpa [#allocation3], 0
    %s19 = scalar_lea.sflag [#allocation3], 1
    %20 = vsyncpa %s19, 0
    loop: start=0, step=1, limit=4
    $region2: #{tpu_custom_call.1} parent=1 // loop_pre_header
      _
    $region3: #{tpu_custom_call.1} parent=1 // loop_header
      %s22 = sphi 0, %s26
      %p23 = scmp.ge.s32.totalorder %s22, 4
      %s32 = sphi 0, %s34
      %s35 = sphi 0, %s32
      %s36 = sphi 0, %s35
      %s52 = sphi 0, %s36
      %s56 = sphi 0, %s56
      %s58 = sphi 0, %s56
      %s59 = sphi 0, %s58
      %s73 = sphi 0, %s59
      %s77 = sphi 0, %s77
      %s79 = sphi 0, %s77
      %s80 = sphi 0, %s79
      %s94 = sphi 0, %s80
      %s98 = sphi 0, %s98
      %s100 = sphi 0, %s98
      %s101 = sphi 0, %s100
      %s115 = sphi 0, %s101
      %s119 = sphi 0, %s119
      %s121 = sphi 0, %s119
      %s122 = sphi 0, %s121
      %s136 = sphi 0, %s122
      %s140 = sphi 0, %s140
      %s142 = sphi 0, %s140
      %s143 = sphi 0, %s142
      %s157 = sphi 0, %s143
      %s161 = sphi 0, %s161
      %s163 = sphi 0, %s161
      %s164 = sphi 0, %s163
      %s178 = sphi 0, %s164
      %s182 = sphi 0, %s182
      %s184 = sphi 0, %s182
      %s185 = sphi 0, %s184
      %s199 = sphi 0, %s185
      %s203 = sphi 0, %s203
      %s205 = sphi 0, %s203
      %s206 = sphi 0, %s205
      %s220 = sphi 0, %s206
      %s224 = sphi 0, %s224
      %s226 = sphi 0, %s224
      %s227 = sphi 0, %s226
      %s241 = sphi 0, %s227
      %s245 = sphi 0, %s245
      %s247 = sphi 0, %s245
      %s248 = sphi 0, %s247
      %s262 = sphi 0, %s248
      %s266 = sphi 0, %s266
      %s268 = sphi 0, %s266
      %s269 = sphi 0, %s268
      %s283 = sphi 0, %s269
      %s287 = sphi 0, %s287
      %s289 = sphi 0, %s287
      %s290 = sphi 0, %s289
      %s304 = sphi 0, %s290
      %s310 = sphi 0, %s312
      %s313 = sphi 0, %s310
      %s314 = sphi 0, %s313
      %s330 = sphi 0, %s314
    $region4: #{tpu_custom_call.1} parent=1 // loop_header_branch
      %25 = sbr.rel (%p23) target = $region8
    $region5: #{tpu_custom_call.1} parent=1 // loop_body
      %s27 = ssub.s32 %s22, 1
      %s28 = ssub.s32 %s22, 2
      %s29 = sadd.s32 %s22, 1
      %s30 = ssub.s32 %s22, %s29
      %p31 = scmp.eq.s32.totalorder %s30, 0
      %s33 = sadd.s32 %s32, 1
      %s34 = scalar_select %p31, %s32, %s33
      %p37 = pneg %p31
      %p38 = scmp.eq.s32.totalorder %s22, 1
      %p39 = por %p37, %p38
      %p40 = scmp.ne.s32.totalorder %s32, %s35
      %p41 = scmp.eq.s32.totalorder %s22, 0
      %p42 = por %p40, %p41
      %p43 = scmp.ne.s32.totalorder %s32, %s35
      %p44 = scmp.eq.s32.totalorder %s27, 1
      %p45 = por %p43, %p44
      %p46 = scmp.ne.s32.totalorder %s35, %s36
      %p47 = scmp.eq.s32.totalorder %s27, 0
      %p48 = por %p46, %p47
      %p49 = scmp.ne.s32.totalorder %s35, %s36
      %p50 = scmp.eq.s32.totalorder %s28, 1
      %p51 = por %p49, %p50
      %p53 = scmp.ne.s32.totalorder %s36, %s52
      %p54 = scmp.eq.s32.totalorder %s28, 0
      %p55 = por %p53, %p54
      %s57 = sadd.s32 %s56, 1
      %p60 = scmp.eq.s32.totalorder %s22, 1
      %p61 = scmp.ne.s32.totalorder %s56, %s58
      %p62 = scmp.eq.s32.totalorder %s22, 0
      %p63 = por %p61, %p62
      %p64 = scmp.ne.s32.totalorder %s56, %s58
      %p65 = scmp.eq.s32.totalorder %s27, 1
      %p66 = por %p64, %p65
      %p67 = scmp.ne.s32.totalorder %s58, %s59
      %p68 = scmp.eq.s32.totalorder %s27, 0
      %p69 = por %p67, %p68
      %p70 = scmp.ne.s32.totalorder %s58, %s59
      %p71 = scmp.eq.s32.totalorder %s28, 1
      %p72 = por %p70, %p71
      %p74 = scmp.ne.s32.totalorder %s59, %s73
      %p75 = scmp.eq.s32.totalorder %s28, 0
      %p76 = por %p74, %p75
      %s78 = sadd.s32 %s77, 1
      %p81 = scmp.eq.s32.totalorder %s22, 1
      %p82 = scmp.ne.s32.totalorder %s77, %s79
      %p83 = scmp.eq.s32.totalorder %s22, 0
      %p84 = por %p82, %p83
      %p85 = scmp.ne.s32.totalorder %s77, %s79
      %p86 = scmp.eq.s32.totalorder %s27, 1
      %p87 = por %p85, %p86
      %p88 = scmp.ne.s32.totalorder %s79, %s80
      %p89 = scmp.eq.s32.totalorder %s27, 0
      %p90 = por %p88, %p89
      %p91 = scmp.ne.s32.totalorder %s79, %s80
      %p92 = scmp.eq.s32.totalorder %s28, 1
      %p93 = por %p91, %p92
      %p95 = scmp.ne.s32.totalorder %s80, %s94
      %p96 = scmp.eq.s32.totalorder %s28, 0
      %p97 = por %p95, %p96
      %s99 = sadd.s32 %s98, 1
      %p102 = scmp.eq.s32.totalorder %s22, 1
      %p103 = scmp.ne.s32.totalorder %s98, %s100
      %p104 = scmp.eq.s32.totalorder %s22, 0
      %p105 = por %p103, %p104
      %p106 = scmp.ne.s32.totalorder %s98, %s100
      %p107 = scmp.eq.s32.totalorder %s27, 1
      %p108 = por %p106, %p107
      %p109 = scmp.ne.s32.totalorder %s100, %s101
      %p110 = scmp.eq.s32.totalorder %s27, 0
      %p111 = por %p109, %p110
      %p112 = scmp.ne.s32.totalorder %s100, %s101
      %p113 = scmp.eq.s32.totalorder %s28, 1
      %p114 = por %p112, %p113
      %p116 = scmp.ne.s32.totalorder %s101, %s115
      %p117 = scmp.eq.s32.totalorder %s28, 0
      %p118 = por %p116, %p117
      %s120 = sadd.s32 %s119, 1
      %p123 = scmp.eq.s32.totalorder %s22, 1
      %p124 = scmp.ne.s32.totalorder %s119, %s121
      %p125 = scmp.eq.s32.totalorder %s22, 0
      %p126 = por %p124, %p125
      %p127 = scmp.ne.s32.totalorder %s119, %s121
      %p128 = scmp.eq.s32.totalorder %s27, 1
      %p129 = por %p127, %p128
      %p130 = scmp.ne.s32.totalorder %s121, %s122
      %p131 = scmp.eq.s32.totalorder %s27, 0
      %p132 = por %p130, %p131
      %p133 = scmp.ne.s32.totalorder %s121, %s122
      %p134 = scmp.eq.s32.totalorder %s28, 1
      %p135 = por %p133, %p134
      %p137 = scmp.ne.s32.totalorder %s122, %s136
      %p138 = scmp.eq.s32.totalorder %s28, 0
      %p139 = por %p137, %p138
      %s141 = sadd.s32 %s140, 1
      %p144 = scmp.eq.s32.totalorder %s22, 1
      %p145 = scmp.ne.s32.totalorder %s140, %s142
      %p146 = scmp.eq.s32.totalorder %s22, 0
      %p147 = por %p145, %p146
      %p148 = scmp.ne.s32.totalorder %s140, %s142
      %p149 = scmp.eq.s32.totalorder %s27, 1
      %p150 = por %p148, %p149
      %p151 = scmp.ne.s32.totalorder %s142, %s143
      %p152 = scmp.eq.s32.totalorder %s27, 0
      %p153 = por %p151, %p152
      %p154 = scmp.ne.s32.totalorder %s142, %s143
      %p155 = scmp.eq.s32.totalorder %s28, 1
      %p156 = por %p154, %p155
      %p158 = scmp.ne.s32.totalorder %s143, %s157
      %p159 = scmp.eq.s32.totalorder %s28, 0
      %p160 = por %p158, %p159
      %s162 = sadd.s32 %s161, 1
      %p165 = scmp.eq.s32.totalorder %s22, 1
      %p166 = scmp.ne.s32.totalorder %s161, %s163
      %p167 = scmp.eq.s32.totalorder %s22, 0
      %p168 = por %p166, %p167
      %p169 = scmp.ne.s32.totalorder %s161, %s163
      %p170 = scmp.eq.s32.totalorder %s27, 1
      %p171 = por %p169, %p170
      %p172 = scmp.ne.s32.totalorder %s163, %s164
      %p173 = scmp.eq.s32.totalorder %s27, 0
      %p174 = por %p172, %p173
      %p175 = scmp.ne.s32.totalorder %s163, %s164
      %p176 = scmp.eq.s32.totalorder %s28, 1
      %p177 = por %p175, %p176
      %p179 = scmp.ne.s32.totalorder %s164, %s178
      %p180 = scmp.eq.s32.totalorder %s28, 0
      %p181 = por %p179, %p180
      %s183 = sadd.s32 %s182, 1
      %p186 = scmp.eq.s32.totalorder %s22, 1
      %p187 = scmp.ne.s32.totalorder %s182, %s184
      %p188 = scmp.eq.s32.totalorder %s22, 0
      %p189 = por %p187, %p188
      %p190 = scmp.ne.s32.totalorder %s182, %s184
      %p191 = scmp.eq.s32.totalorder %s27, 1
      %p192 = por %p190, %p191
      %p193 = scmp.ne.s32.totalorder %s184, %s185
      %p194 = scmp.eq.s32.totalorder %s27, 0
      %p195 = por %p193, %p194
      %p196 = scmp.ne.s32.totalorder %s184, %s185
      %p197 = scmp.eq.s32.totalorder %s28, 1
      %p198 = por %p196, %p197
      %p200 = scmp.ne.s32.totalorder %s185, %s199
      %p201 = scmp.eq.s32.totalorder %s28, 0
      %p202 = por %p200, %p201
      %s204 = sadd.s32 %s203, 1
      %p207 = scmp.eq.s32.totalorder %s22, 1
      %p208 = scmp.ne.s32.totalorder %s203, %s205
      %p209 = scmp.eq.s32.totalorder %s22, 0
      %p210 = por %p208, %p209
      %p211 = scmp.ne.s32.totalorder %s203, %s205
      %p212 = scmp.eq.s32.totalorder %s27, 1
      %p213 = por %p211, %p212
      %p214 = scmp.ne.s32.totalorder %s205, %s206
      %p215 = scmp.eq.s32.totalorder %s27, 0
      %p216 = por %p214, %p215
      %p217 = scmp.ne.s32.totalorder %s205, %s206
      %p218 = scmp.eq.s32.totalorder %s28, 1
      %p219 = por %p217, %p218
      %p221 = scmp.ne.s32.totalorder %s206, %s220
      %p222 = scmp.eq.s32.totalorder %s28, 0
      %p223 = por %p221, %p222
      %s225 = sadd.s32 %s224, 1
      %p228 = scmp.eq.s32.totalorder %s22, 1
      %p229 = scmp.ne.s32.totalorder %s224, %s226
      %p230 = scmp.eq.s32.totalorder %s22, 0
      %p231 = por %p229, %p230
      %p232 = scmp.ne.s32.totalorder %s224, %s226
      %p233 = scmp.eq.s32.totalorder %s27, 1
      %p234 = por %p232, %p233
      %p235 = scmp.ne.s32.totalorder %s226, %s227
      %p236 = scmp.eq.s32.totalorder %s27, 0
      %p237 = por %p235, %p236
      %p238 = scmp.ne.s32.totalorder %s226, %s227
      %p239 = scmp.eq.s32.totalorder %s28, 1
      %p240 = por %p238, %p239
      %p242 = scmp.ne.s32.totalorder %s227, %s241
      %p243 = scmp.eq.s32.totalorder %s28, 0
      %p244 = por %p242, %p243
      %s246 = sadd.s32 %s245, 1
      %p249 = scmp.eq.s32.totalorder %s22, 1
      %p250 = scmp.ne.s32.totalorder %s245, %s247
      %p251 = scmp.eq.s32.totalorder %s22, 0
      %p252 = por %p250, %p251
      %p253 = scmp.ne.s32.totalorder %s245, %s247
      %p254 = scmp.eq.s32.totalorder %s27, 1
      %p255 = por %p253, %p254
      %p256 = scmp.ne.s32.totalorder %s247, %s248
      %p257 = scmp.eq.s32.totalorder %s27, 0
      %p258 = por %p256, %p257
      %p259 = scmp.ne.s32.totalorder %s247, %s248
      %p260 = scmp.eq.s32.totalorder %s28, 1
      %p261 = por %p259, %p260
      %p263 = scmp.ne.s32.totalorder %s248, %s262
      %p264 = scmp.eq.s32.totalorder %s28, 0
      %p265 = por %p263, %p264
      %s267 = sadd.s32 %s266, 1
      %p270 = scmp.eq.s32.totalorder %s22, 1
      %p271 = scmp.ne.s32.totalorder %s266, %s268
      %p272 = scmp.eq.s32.totalorder %s22, 0
      %p273 = por %p271, %p272
      %p274 = scmp.ne.s32.totalorder %s266, %s268
      %p275 = scmp.eq.s32.totalorder %s27, 1
      %p276 = por %p274, %p275
      %p277 = scmp.ne.s32.totalorder %s268, %s269
      %p278 = scmp.eq.s32.totalorder %s27, 0
      %p279 = por %p277, %p278
      %p280 = scmp.ne.s32.totalorder %s268, %s269
      %p281 = scmp.eq.s32.totalorder %s28, 1
      %p282 = por %p280, %p281
      %p284 = scmp.ne.s32.totalorder %s269, %s283
      %p285 = scmp.eq.s32.totalorder %s28, 0
      %p286 = por %p284, %p285
      %s288 = sadd.s32 %s287, 1
      %p291 = scmp.eq.s32.totalorder %s22, 1
      %p292 = scmp.ne.s32.totalorder %s287, %s289
      %p293 = scmp.eq.s32.totalorder %s22, 0
      %p294 = por %p292, %p293
      %p295 = scmp.ne.s32.totalorder %s287, %s289
      %p296 = scmp.eq.s32.totalorder %s27, 1
      %p297 = por %p295, %p296
      %p298 = scmp.ne.s32.totalorder %s289, %s290
      %p299 = scmp.eq.s32.totalorder %s27, 0
      %p300 = por %p298, %p299
      %p301 = scmp.ne.s32.totalorder %s289, %s290
      %p302 = scmp.eq.s32.totalorder %s28, 1
      %p303 = por %p301, %p302
      %p305 = scmp.ne.s32.totalorder %s290, %s304
      %p306 = scmp.eq.s32.totalorder %s28, 0
      %p307 = por %p305, %p306
      %s308 = ssub.s32 %s22, %s29
      %p309 = scmp.eq.s32.totalorder %s308, 0
      %s311 = sadd.s32 %s310, 1
      %s312 = scalar_select %p309, %s310, %s311
      %p315 = pneg %p309
      %p316 = scmp.eq.s32.totalorder %s22, 1
      %p317 = por %p315, %p316
      %p318 = scmp.ne.s32.totalorder %s310, %s313
      %p319 = scmp.eq.s32.totalorder %s22, 0
      %p320 = por %p318, %p319
      %p321 = scmp.ne.s32.totalorder %s310, %s313
      %p322 = scmp.eq.s32.totalorder %s27, 1
      %p323 = por %p321, %p322
      %p324 = scmp.ne.s32.totalorder %s313, %s314
      %p325 = scmp.eq.s32.totalorder %s27, 0
      %p326 = por %p324, %p325
      %p327 = scmp.ne.s32.totalorder %s313, %s314
      %p328 = scmp.eq.s32.totalorder %s28, 1
      %p329 = por %p327, %p328
      %p331 = scmp.ne.s32.totalorder %s314, %s330
      %p332 = scmp.eq.s32.totalorder %s28, 0
      %p333 = por %p331, %p332
      %p334 = scmp.le.s32.totalorder 1, %s22
      %p335 = scmp.lt.s32.totalorder %s22, 3
      %p336 = pnand %p334, %p335
      %p337 = pneg %p336
      // Predicated region
      $region9: #{tpu_custom_call.1} parent=5 // pred_check
        _
      $region10: #{tpu_custom_call.1} parent=5 // pred_check_branch
        %339 = sbr.rel (%p336) target = $region12
      $region11: #{tpu_custom_call.1} parent=5 // pred_region
        %s340 = ssub.s32 %s22, 1
        // Predicated region
        $region13: #{tpu_custom_call.1} parent=11 // pred_check
          %p341 = pneg %p69
        $region14: #{tpu_custom_call.1} parent=11 // pred_check_branch
          %343 = sbr.rel (%p341) target = $region16
        $region15: #{tpu_custom_call.1} parent=11 // pred_region
          _
        $region16: #{tpu_custom_call.1} parent=11 // pred_fallthru
          _
        // Predicated region
        $region17: #{tpu_custom_call.1} parent=11 // pred_check
          %p344 = pneg %p90
        $region18: #{tpu_custom_call.1} parent=11 // pred_check_branch
          %346 = sbr.rel (%p344) target = $region20
        $region19: #{tpu_custom_call.1} parent=11 // pred_region
          _
        $region20: #{tpu_custom_call.1} parent=11 // pred_fallthru
          _
        // Predicated region
        $region21: #{tpu_custom_call.1} parent=11 // pred_check
          %p347 = pneg %p111
        $region22: #{tpu_custom_call.1} parent=11 // pred_check_branch
          %349 = sbr.rel (%p347) target = $region24
        $region23: #{tpu_custom_call.1} parent=11 // pred_region
          _
        $region24: #{tpu_custom_call.1} parent=11 // pred_fallthru
          _
        // Predicated region
        $region25: #{tpu_custom_call.1} parent=11 // pred_check
          %p350 = pneg %p132
        $region26: #{tpu_custom_call.1} parent=11 // pred_check_branch
          %352 = sbr.rel (%p350) target = $region28
        $region27: #{tpu_custom_call.1} parent=11 // pred_region
          _
        $region28: #{tpu_custom_call.1} parent=11 // pred_fallthru
          _
        // Predicated region
        $region29: #{tpu_custom_call.1} parent=11 // pred_check
          %p353 = pneg %p153
        $region30: #{tpu_custom_call.1} parent=11 // pred_check_branch
          %355 = sbr.rel (%p353) target = $region32
        $region31: #{tpu_custom_call.1} parent=11 // pred_region
          _
        $region32: #{tpu_custom_call.1} parent=11 // pred_fallthru
          _
        // Predicated region
        $region33: #{tpu_custom_call.1} parent=11 // pred_check
          %p356 = pneg %p174
        $region34: #{tpu_custom_call.1} parent=11 // pred_check_branch
          %358 = sbr.rel (%p356) target = $region36
        $region35: #{tpu_custom_call.1} parent=11 // pred_region
          _
        $region36: #{tpu_custom_call.1} parent=11 // pred_fallthru
          _
        // Predicated region
        $region37: #{tpu_custom_call.1} parent=11 // pred_check
          %p359 = pneg %p195
        $region38: #{tpu_custom_call.1} parent=11 // pred_check_branch
          %361 = sbr.rel (%p359) target = $region40
        $region39: #{tpu_custom_call.1} parent=11 // pred_region
          _
        $region40: #{tpu_custom_call.1} parent=11 // pred_fallthru
          _
        // Predicated region
        $region41: #{tpu_custom_call.1} parent=11 // pred_check
          %p362 = pneg %p216
        $region42: #{tpu_custom_call.1} parent=11 // pred_check_branch
          %364 = sbr.rel (%p362) target = $region44
        $region43: #{tpu_custom_call.1} parent=11 // pred_region
          _
        $region44: #{tpu_custom_call.1} parent=11 // pred_fallthru
          _
        // Predicated region
        $region45: #{tpu_custom_call.1} parent=11 // pred_check
          %p365 = pneg %p237
        $region46: #{tpu_custom_call.1} parent=11 // pred_check_branch
          %367 = sbr.rel (%p365) target = $region48
        $region47: #{tpu_custom_call.1} parent=11 // pred_region
          _
        $region48: #{tpu_custom_call.1} parent=11 // pred_fallthru
          _
        // Predicated region
        $region49: #{tpu_custom_call.1} parent=11 // pred_check
          %p368 = pneg %p258
        $region50: #{tpu_custom_call.1} parent=11 // pred_check_branch
          %370 = sbr.rel (%p368) target = $region52
        $region51: #{tpu_custom_call.1} parent=11 // pred_region
          _
        $region52: #{tpu_custom_call.1} parent=11 // pred_fallthru
          _
        // Predicated region
        $region53: #{tpu_custom_call.1} parent=11 // pred_check
          %p371 = pneg %p279
        $region54: #{tpu_custom_call.1} parent=11 // pred_check_branch
          %373 = sbr.rel (%p371) target = $region56
        $region55: #{tpu_custom_call.1} parent=11 // pred_region
          _
        $region56: #{tpu_custom_call.1} parent=11 // pred_fallthru
          _
        // Predicated region
        $region57: #{tpu_custom_call.1} parent=11 // pred_check
          %p374 = pneg %p300
        $region58: #{tpu_custom_call.1} parent=11 // pred_check_branch
          %376 = sbr.rel (%p374) target = $region60
        $region59: #{tpu_custom_call.1} parent=11 // pred_region
          _
        $region60: #{tpu_custom_call.1} parent=11 // pred_fallthru
          _
      $region12: #{tpu_custom_call.1} parent=5 // pred_fallthru
        _
      %p377 = scmp.lt.s32.totalorder %s22, 2
      // Predicated region
      $region61: #{tpu_custom_call.1} parent=5 // pred_check
        %p378 = pneg %p377
      $region62: #{tpu_custom_call.1} parent=5 // pred_check_branch
        %380 = sbr.rel (%p378) target = $region64
      $region63: #{tpu_custom_call.1} parent=5 // pred_region
        // Predicated region
        $region65: #{tpu_custom_call.1} parent=63 // pred_check
          %p381 = pneg %p42
        $region66: #{tpu_custom_call.1} parent=63 // pred_check_branch
          %383 = sbr.rel (%p381) target = $region68
        $region67: #{tpu_custom_call.1} parent=63 // pred_region
          %p384 = scmp.lt.s32.totalorder %s22, 1
          %s385 = scalar_select %p384, %s22, 1
          %s386 = smul.addr %s385, 8
          %s387 = scalar_lea.vmem %s0, %s386
        $region68: #{tpu_custom_call.1} parent=63 // pred_fallthru
          _
      $region64: #{tpu_custom_call.1} parent=5 // pred_fallthru
        _
      %p388 = scmp.le.s32.totalorder 1, %s22
      %p389 = scmp.lt.s32.totalorder %s22, 3
      %p390 = pnand %p388, %p389
      %p391 = pneg %p390
      // Predicated region
      $region69: #{tpu_custom_call.1} parent=5 // pred_check
        _
      $region70: #{tpu_custom_call.1} parent=5 // pred_check_branch
        %393 = sbr.rel (%p390) target = $region72
      $region71: #{tpu_custom_call.1} parent=5 // pred_region
        %s394 = ssub.s32 %s22, 1
        %p395 = scmp.lt.s32.totalorder %s27, 1
        %s396 = scalar_select %p395, %s27, 1
        %s397 = smul.addr %s396, 8
        %s398 = scalar_lea.vmem %s0, %s397
        %p399 = pneg %p48
        %p400 = pneg %p45
        %p401 = pneg %p69
        %p402 = pneg %p66
        %p403 = pneg %p90
        %p404 = pneg %p87
        %p405 = pneg %p111
        %p406 = pneg %p108
        %p407 = pneg %p132
        %p408 = pneg %p129
        %p409 = pneg %p153
        %p410 = pneg %p150
        %p411 = pneg %p174
        %p412 = pneg %p171
        %p413 = pneg %p195
        %p414 = pneg %p192
        %p415 = pneg %p216
        %p416 = pneg %p213
        %p417 = pneg %p237
        %p418 = pneg %p234
        %p419 = pneg %p258
        %p420 = pneg %p255
        %p421 = pneg %p279
        %p422 = pneg %p276
        %p423 = pneg %p300
        %p424 = pneg %p297
        %p425 = pneg %p326
        %p426 = pneg %p323
        %s427 = sand.u32 %s313, 1
        %s428 = scalar_lea.sflag [#allocation3], %s427
        %s429 = sand.u32 %s313, 1
        %s430 = smul.addr %s429, 8
        %s431 = scalar_lea.vmem [#allocation2], %s430
        %p432 = scmp.lt.s32.totalorder %s27, 1
        %s433 = scalar_select %p432, %s27, 1
        %s434 = smul.addr %s433, 8
        %s435 = scalar_lea.vmem %s0, %s434
        %v436 = vld [vmem:[%s435] sm:$0xff]
        %v437 = vld [vmem:[%s5] sm:$0x1]
        %v438 = vld [vmem:[%s6] sm:$0x1]
        %vm439 = vcmask 261120
        %v440 = vsel %vm439, %v436, 0.0
        %441 = vadd.xlane.f32.xlu0 %v440
        %v442 = vpop.xlane.xlu0 %441
        %v443 = vrcp.pop 32.0
        %v444 = vmul.f32 32.0, %v443
        %v445 = vsub.f32 1.0, %v444
        %v446 = vmul.f32 %v443, %v445
        %v447 = vadd.f32 %v443, %v446
        %vm448 = vweird.f32 %v443
        %v449 = vsel %vm448, %v443, %v447
        %v450 = vmul.f32 %v442, %v449
        %v451 = vsub.f32 %v436, %v450
        %v452 = vmul.f32 %v451, %v451
        %v453 = vsel %vm439, %v452, 0.0
        %454 = vadd.xlane.f32.xlu0 %v453
        %v455 = vpop.xlane.xlu0 %454
        %v456 = vmul.f32 %v455, %v449
        %v457 = vadd.f32 %v456, 1e-05
        %v458 = vrsqrt.pop %v457
        %v459 = vmul.f32 %v458, %v457
        %v460 = vmul.f32 %v459, %v458
        %v461 = vmul.f32 0.5, %v460
        %v462 = vsub.f32 1.5, %v461
        %v463 = vmul.f32 %v458, %v462
        %vm464 = vweird.f32 %v457
        %vm465 = vweird.f32 %v458
        %vm466 = vmor %vm464, %vm465
        %v467 = vsel %vm466, %v458, %v463
        %v468 = vmul.f32 %v451, %v467
        %v470 = vperm.slane %v437, 0
        %v472 = vmul.f32 %v468, %v470
        %v474 = vperm.slane %v438, 0
        %v476 = vadd.f32 %v472, %v474
        %v477 = vld [vmem:[%s1] sm:$0xff]
        %v478 = vld [vmem:[%s1 + $0x8] sm:$0xff]
        %v479 = vld [vmem:[%s1 + $0x10] sm:$0xff]
        %v480 = vld [vmem:[%s1 + $0x18] sm:$0xff]
        %v481 = vld [vmem:[%s1 + $0x20] sm:$0xff]
        %v482 = vld [vmem:[%s1 + $0x28] sm:$0xff]
        %v483 = vld [vmem:[%s1 + $0x30] sm:$0xff]
        %v484 = vld [vmem:[%s1 + $0x38] sm:$0xff]
        %v485 = vld [vmem:[%s1 + $0x40] sm:$0xff]
        %v486 = vld [vmem:[%s1 + $0x48] sm:$0xff]
        %v487 = vld [vmem:[%s1 + $0x50] sm:$0xff]
        %v488 = vld [vmem:[%s1 + $0x58] sm:$0xff]
        %v489 = vld [vmem:[%s1 + $0x60] sm:$0xff]
        %v490 = vld [vmem:[%s1 + $0x68] sm:$0xff]
        %v491 = vld [vmem:[%s1 + $0x70] sm:$0xff]
        %v492 = vld [vmem:[%s1 + $0x78] sm:$0xff]
        %v493 = vld [vmem:[%s2] sm:$0x1]
        %v494 = vld [vmem:[%s2 + $0x1] sm:$0x1]
        %v495 = vld [vmem:[%s2 + $0x2] sm:$0x1]
        %v496 = vld [vmem:[%s2 + $0x3] sm:$0x1]
        %v501 = vperm.slane %v493, 0
        %v502 = vperm.slane %v494, 0
        %v503 = vperm.slane %v495, 0
        %v504 = vperm.slane %v496, 0
        %v510 = vsel %vm439, %v476, 0
        %512 = vmatpush.msra.mxu0 0.0
        %513 = vmatpush.msra.mxu0 0.0
        %514 = vmatpush.msra.mxu0 0.0
        %515 = vmatpush.msra.mxu0 0.0
        %516 = vmatpush.msra.mxu0 0.0
        %517 = vmatpush.msra.mxu0 0.0
        %518 = vmatpush.msra.mxu0 0.0
        %519 = vmatpush.msra.mxu0 0.0
        %520 = vmatpush.msra.mxu0 0.0
        %521 = vmatpush.msra.mxu0 0.0
        %522 = vmatpush.msra.mxu0 0.0
        %523 = vmatpush.msra.mxu0 0.0
        %524 = vmatpush.msra.mxu0 %v480
        %525 = vmatpush.msra.mxu0 %v479
        %526 = vmatpush.msra.mxu0 %v478
        %527 = vmatpush.msra.mxu0 %v477
        %528 = vmatmul.f32.gmra.mxu0 %v510
        %v529 = vpop.f32.mrf.mxu0
        %v530 = vadd.f32 %v501, %v529
        %531 = vdwg.mxu0
        %532 = vmatpush.msra.mxu0 0.0
        %533 = vmatpush.msra.mxu0 0.0
        %534 = vmatpush.msra.mxu0 0.0
        %535 = vmatpush.msra.mxu0 0.0
        %536 = vmatpush.msra.mxu0 0.0
        %537 = vmatpush.msra.mxu0 0.0
        %538 = vmatpush.msra.mxu0 0.0
        %539 = vmatpush.msra.mxu0 0.0
        %540 = vmatpush.msra.mxu0 0.0
        %541 = vmatpush.msra.mxu0 0.0
        %542 = vmatpush.msra.mxu0 0.0
        %543 = vmatpush.msra.mxu0 0.0
        %544 = vmatpush.msra.mxu0 %v484
        %545 = vmatpush.msra.mxu0 %v483
        %546 = vmatpush.msra.mxu0 %v482
        %547 = vmatpush.msra.mxu0 %v481
        %548 = vmatmul.f32.gmra.mxu0 %v510
        %v549 = vpop.f32.mrf.mxu0
        %v550 = vadd.f32 %v502, %v549
        %551 = vdwg.mxu0
        %552 = vmatpush.msra.mxu0 0.0
        %553 = vmatpush.msra.mxu0 0.0
        %554 = vmatpush.msra.mxu0 0.0
        %555 = vmatpush.msra.mxu0 0.0
        %556 = vmatpush.msra.mxu0 0.0
        %557 = vmatpush.msra.mxu0 0.0
        %558 = vmatpush.msra.mxu0 0.0
        %559 = vmatpush.msra.mxu0 0.0
        %560 = vmatpush.msra.mxu0 0.0
        %561 = vmatpush.msra.mxu0 0.0
        %562 = vmatpush.msra.mxu0 0.0
        %563 = vmatpush.msra.mxu0 0.0
        %564 = vmatpush.msra.mxu0 %v488
        %565 = vmatpush.msra.mxu0 %v487
        %566 = vmatpush.msra.mxu0 %v486
        %567 = vmatpush.msra.mxu0 %v485
        %568 = vmatmul.f32.gmra.mxu0 %v510
        %v569 = vpop.f32.mrf.mxu0
        %v570 = vadd.f32 %v503, %v569
        %571 = vdwg.mxu0
        %572 = vmatpush.msra.mxu0 0.0
        %573 = vmatpush.msra.mxu0 0.0
        %574 = vmatpush.msra.mxu0 0.0
        %575 = vmatpush.msra.mxu0 0.0
        %576 = vmatpush.msra.mxu0 0.0
        %577 = vmatpush.msra.mxu0 0.0
        %578 = vmatpush.msra.mxu0 0.0
        %579 = vmatpush.msra.mxu0 0.0
        %580 = vmatpush.msra.mxu0 0.0
        %581 = vmatpush.msra.mxu0 0.0
        %582 = vmatpush.msra.mxu0 0.0
        %583 = vmatpush.msra.mxu0 0.0
        %584 = vmatpush.msra.mxu0 %v492
        %585 = vmatpush.msra.mxu0 %v491
        %586 = vmatpush.msra.mxu0 %v490
        %587 = vmatpush.msra.mxu0 %v489
        %588 = vmatmul.f32.gmra.mxu0 %v510
        %v589 = vpop.f32.mrf.mxu0
        %v590 = vadd.f32 %v504, %v589
        %591 = vdwg.mxu0
        %v592 = vmul.f32 %v530, 0.35355338
        %v593 = vmul.f32 %v550, 0.35355338
        %v594 = vmul.f32 %v570, 0.35355338
        %v595 = vmul.f32 %v590, 0.35355338
        %597 = vrot.lane.b32.xlu0 %v530, 120
        %v598 = vpop.permute.xlu0 %597
        %vm599 = vcmask 64512
        %v601 = vsel %vm599, %v592, 0
        %v603 = vsel %vm599, %v598, 0
        %605 = vmatpush.xpose.msra.mxu0 0.0
        %606 = vmatpush.xpose.msra.mxu0 0.0
        %607 = vmatpush.xpose.msra.mxu0 0.0
        %608 = vmatpush.xpose.msra.mxu0 0.0
        %609 = vmatpush.xpose.msra.mxu0 0.0
        %610 = vmatpush.xpose.msra.mxu0 0.0
        %611 = vmatpush.xpose.msra.mxu0 0.0
        %612 = vmatpush.xpose.msra.mxu0 0.0
        %613 = vmatpush.xpose.msra.mxu0 0.0
        %614 = vmatpush.xpose.msra.mxu0 0.0
        %615 = vmatpush.xpose.msra.mxu0 0.0
        %616 = vmatpush.xpose.msra.mxu0 0.0
        %617 = vmatpush.xpose.msra.mxu0 0.0
        %618 = vmatpush.xpose.msra.mxu0 0.0
        %619 = vmatpush.xpose.msra.mxu0 0.0
        %620 = vmatpush.xpose.msra.mxu0 %v603
        %621 = vmatmul.f32.gmra.mxu0 %v601
        %v622 = vpop.f32.mrf.mxu0
        %v623 = vadd.f32 0.0, %v622
        %624 = vdwg.mxu0
        %626 = vrot.lane.b32.xlu0 %v550, 120
        %v627 = vpop.permute.xlu0 %626
        %v629 = vsel %vm599, %v593, 0
        %v631 = vsel %vm599, %v627, 0
        %633 = vmatpush.xpose.msra.mxu0 0.0
        %634 = vmatpush.xpose.msra.mxu0 0.0
        %635 = vmatpush.xpose.msra.mxu0 0.0
        %636 = vmatpush.xpose.msra.mxu0 0.0
        %637 = vmatpush.xpose.msra.mxu0 0.0
        %638 = vmatpush.xpose.msra.mxu0 0.0
        %639 = vmatpush.xpose.msra.mxu0 0.0
        %640 = vmatpush.xpose.msra.mxu0 0.0
        %641 = vmatpush.xpose.msra.mxu0 0.0
        %642 = vmatpush.xpose.msra.mxu0 0.0
        %643 = vmatpush.xpose.msra.mxu0 0.0
        %644 = vmatpush.xpose.msra.mxu0 0.0
        %645 = vmatpush.xpose.msra.mxu0 0.0
        %646 = vmatpush.xpose.msra.mxu0 0.0
        %647 = vmatpush.xpose.msra.mxu0 0.0
        %648 = vmatpush.xpose.msra.mxu0 %v631
        %649 = vmatmul.f32.gmra.mxu0 %v629
        %v650 = vpop.f32.mrf.mxu0
        %v651 = vadd.f32 0.0, %v650
        %652 = vdwg.mxu0
        %654 = vrot.lane.b32.xlu0 %v570, 120
        %v655 = vpop.permute.xlu0 %654
        %v657 = vsel %vm599, %v594, 0
        %v659 = vsel %vm599, %v655, 0
        %661 = vmatpush.xpose.msra.mxu0 0.0
        %662 = vmatpush.xpose.msra.mxu0 0.0
        %663 = vmatpush.xpose.msra.mxu0 0.0
        %664 = vmatpush.xpose.msra.mxu0 0.0
        %665 = vmatpush.xpose.msra.mxu0 0.0
        %666 = vmatpush.xpose.msra.mxu0 0.0
        %667 = vmatpush.xpose.msra.mxu0 0.0
        %668 = vmatpush.xpose.msra.mxu0 0.0
        %669 = vmatpush.xpose.msra.mxu0 0.0
        %670 = vmatpush.xpose.msra.mxu0 0.0
        %671 = vmatpush.xpose.msra.mxu0 0.0
        %672 = vmatpush.xpose.msra.mxu0 0.0
        %673 = vmatpush.xpose.msra.mxu0 0.0
        %674 = vmatpush.xpose.msra.mxu0 0.0
        %675 = vmatpush.xpose.msra.mxu0 0.0
        %676 = vmatpush.xpose.msra.mxu0 %v659
        %677 = vmatmul.f32.gmra.mxu0 %v657
        %v678 = vpop.f32.mrf.mxu0
        %v679 = vadd.f32 0.0, %v678
        %680 = vdwg.mxu0
        %682 = vrot.lane.b32.xlu0 %v590, 120
        %v683 = vpop.permute.xlu0 %682
        %v685 = vsel %vm599, %v595, 0
        %v687 = vsel %vm599, %v683, 0
        %689 = vmatpush.xpose.msra.mxu0 0.0
        %690 = vmatpush.xpose.msra.mxu0 0.0
        %691 = vmatpush.xpose.msra.mxu0 0.0
        %692 = vmatpush.xpose.msra.mxu0 0.0
        %693 = vmatpush.xpose.msra.mxu0 0.0
        %694 = vmatpush.xpose.msra.mxu0 0.0
        %695 = vmatpush.xpose.msra.mxu0 0.0
        %696 = vmatpush.xpose.msra.mxu0 0.0
        %697 = vmatpush.xpose.msra.mxu0 0.0
        %698 = vmatpush.xpose.msra.mxu0 0.0
        %699 = vmatpush.xpose.msra.mxu0 0.0
        %700 = vmatpush.xpose.msra.mxu0 0.0
        %701 = vmatpush.xpose.msra.mxu0 0.0
        %702 = vmatpush.xpose.msra.mxu0 0.0
        %703 = vmatpush.xpose.msra.mxu0 0.0
        %704 = vmatpush.xpose.msra.mxu0 %v687
        %705 = vmatmul.f32.gmra.mxu0 %v685
        %v706 = vpop.f32.mrf.mxu0
        %v707 = vadd.f32 0.0, %v706
        %708 = vdwg.mxu0
        %v709 = vsel %vm599, %v623, -inf
        %710 = vmax.xlane.f32.xlu0 %v709
        %v711 = vpop.xlane.xlu0 %710
        %v712 = vsel %vm599, %v651, -inf
        %713 = vmax.xlane.f32.xlu0 %v712
        %v714 = vpop.xlane.xlu0 %713
        %v715 = vsel %vm599, %v679, -inf
        %716 = vmax.xlane.f32.xlu0 %v715
        %v717 = vpop.xlane.xlu0 %716
        %v718 = vsel %vm599, %v707, -inf
        %719 = vmax.xlane.f32.xlu0 %v718
        %v720 = vpop.xlane.xlu0 %719
        %v721 = vsub.f32 %v623, %v711
        %v722 = vsub.f32 %v651, %v714
        %v723 = vsub.f32 %v679, %v717
        %v724 = vsub.f32 %v707, %v720
        %v725 = vmul.f32 %v721, 1.442695
        %v726 = vpow.pop %v725
        %v727 = vmul.f32 %v722, 1.442695
        %v728 = vpow.pop %v727
        %v729 = vmul.f32 %v723, 1.442695
        %v730 = vpow.pop %v729
        %v731 = vmul.f32 %v724, 1.442695
        %v732 = vpow.pop %v731
        %v733 = vsel %vm599, %v726, 0.0
        %734 = vadd.xlane.f32.xlu0 %v733
        %v735 = vpop.xlane.xlu0 %734
        %v736 = vsel %vm599, %v728, 0.0
        %737 = vadd.xlane.f32.xlu0 %v736
        %v738 = vpop.xlane.xlu0 %737
        %v739 = vsel %vm599, %v730, 0.0
        %740 = vadd.xlane.f32.xlu0 %v739
        %v741 = vpop.xlane.xlu0 %740
        %v742 = vsel %vm599, %v732, 0.0
        %743 = vadd.xlane.f32.xlu0 %v742
        %v744 = vpop.xlane.xlu0 %743
        %v745 = vrcp.pop %v735
        %v746 = vrcp.pop %v738
        %v747 = vrcp.pop %v741
        %v748 = vrcp.pop %v744
        %v749 = vmul.f32 %v726, %v745
        %v750 = vmul.f32 %v728, %v746
        %v751 = vmul.f32 %v730, %v747
        %v752 = vmul.f32 %v732, %v748
        %753 = vrot.lane.b32.xlu0 %v530, 112
        %v754 = vpop.permute.xlu0 %753
        %v757 = vsel %vm599, %v749, 0
        %759 = vmatpush.msra.mxu0 0.0
        %760 = vmatpush.msra.mxu0 0.0
        %761 = vmatpush.msra.mxu0 0.0
        %762 = vmatpush.msra.mxu0 0.0
        %763 = vmatpush.msra.mxu0 0.0
        %764 = vmatpush.msra.mxu0 0.0
        %765 = vmatpush.msra.mxu0 0.0
        %766 = vmatpush.msra.mxu0 0.0
        %767 = vmatpush.msra.mxu0 0.0
        %768 = vmatpush.msra.mxu0 0.0
        %769 = vmatpush.msra.mxu0 0.0
        %770 = vmatpush.msra.mxu0 0.0
        %771 = vmatpush.msra.mxu0 0.0
        %772 = vmatpush.msra.mxu0 0.0
        %773 = vmatpush.msra.mxu0 0.0
        %774 = vmatpush.msra.mxu0 %v754
        %775 = vmatmul.f32.gmra.mxu0 %v757
        %v776 = vpop.f32.mrf.mxu0
        %v777 = vadd.f32 0.0, %v776
        %778 = vdwg.mxu0
        %779 = vrot.lane.b32.xlu0 %v550, 112
        %v780 = vpop.permute.xlu0 %779
        %v783 = vsel %vm599, %v750, 0
        %785 = vmatpush.msra.mxu0 0.0
        %786 = vmatpush.msra.mxu0 0.0
        %787 = vmatpush.msra.mxu0 0.0
        %788 = vmatpush.msra.mxu0 0.0
        %789 = vmatpush.msra.mxu0 0.0
        %790 = vmatpush.msra.mxu0 0.0
        %791 = vmatpush.msra.mxu0 0.0
        %792 = vmatpush.msra.mxu0 0.0
        %793 = vmatpush.msra.mxu0 0.0
        %794 = vmatpush.msra.mxu0 0.0
        %795 = vmatpush.msra.mxu0 0.0
        %796 = vmatpush.msra.mxu0 0.0
        %797 = vmatpush.msra.mxu0 0.0
        %798 = vmatpush.msra.mxu0 0.0
        %799 = vmatpush.msra.mxu0 0.0
        %800 = vmatpush.msra.mxu0 %v780
        %801 = vmatmul.f32.gmra.mxu0 %v783
        %v802 = vpop.f32.mrf.mxu0
        %v803 = vadd.f32 0.0, %v802
        %804 = vdwg.mxu0
        %805 = vrot.lane.b32.xlu0 %v570, 112
        %v806 = vpop.permute.xlu0 %805
        %v809 = vsel %vm599, %v751, 0
        %811 = vmatpush.msra.mxu0 0.0
        %812 = vmatpush.msra.mxu0 0.0
        %813 = vmatpush.msra.mxu0 0.0
        %814 = vmatpush.msra.mxu0 0.0
        %815 = vmatpush.msra.mxu0 0.0
        %816 = vmatpush.msra.mxu0 0.0
        %817 = vmatpush.msra.mxu0 0.0
        %818 = vmatpush.msra.mxu0 0.0
        %819 = vmatpush.msra.mxu0 0.0
        %820 = vmatpush.msra.mxu0 0.0
        %821 = vmatpush.msra.mxu0 0.0
        %822 = vmatpush.msra.mxu0 0.0
        %823 = vmatpush.msra.mxu0 0.0
        %824 = vmatpush.msra.mxu0 0.0
        %825 = vmatpush.msra.mxu0 0.0
        %826 = vmatpush.msra.mxu0 %v806
        %827 = vmatmul.f32.gmra.mxu0 %v809
        %v828 = vpop.f32.mrf.mxu0
        %v829 = vadd.f32 0.0, %v828
        %830 = vdwg.mxu0
        %831 = vrot.lane.b32.xlu0 %v590, 112
        %v832 = vpop.permute.xlu0 %831
        %v835 = vsel %vm599, %v752, 0
        %837 = vmatpush.msra.mxu0 0.0
        %838 = vmatpush.msra.mxu0 0.0
        %839 = vmatpush.msra.mxu0 0.0
        %840 = vmatpush.msra.mxu0 0.0
        %841 = vmatpush.msra.mxu0 0.0
        %842 = vmatpush.msra.mxu0 0.0
        %843 = vmatpush.msra.mxu0 0.0
        %844 = vmatpush.msra.mxu0 0.0
        %845 = vmatpush.msra.mxu0 0.0
        %846 = vmatpush.msra.mxu0 0.0
        %847 = vmatpush.msra.mxu0 0.0
        %848 = vmatpush.msra.mxu0 0.0
        %849 = vmatpush.msra.mxu0 0.0
        %850 = vmatpush.msra.mxu0 0.0
        %851 = vmatpush.msra.mxu0 0.0
        %852 = vmatpush.msra.mxu0 %v832
        %853 = vmatmul.f32.gmra.mxu0 %v835
        %v854 = vpop.f32.mrf.mxu0
        %v855 = vadd.f32 0.0, %v854
        %856 = vdwg.mxu0
        %v857 = vld [vmem:[%s3] sm:$0xff]
        %v858 = vld [vmem:[%s3 + $0x8] sm:$0xff]
        %v859 = vld [vmem:[%s3 + $0x10] sm:$0xff]
        %v860 = vld [vmem:[%s3 + $0x18] sm:$0xff]
        %v862 = vsel %vm599, %v777, 0
        %864 = vmatpush.msra.mxu0 0.0
        %865 = vmatpush.msra.mxu0 0.0
        %866 = vmatpush.msra.mxu0 0.0
        %867 = vmatpush.msra.mxu0 0.0
        %868 = vmatpush.msra.mxu0 0.0
        %869 = vmatpush.msra.mxu0 0.0
        %870 = vmatpush.msra.mxu0 0.0
        %871 = vmatpush.msra.mxu0 0.0
        %872 = vmatpush.msra.mxu0 0.0
        %873 = vmatpush.msra.mxu0 0.0
        %874 = vmatpush.msra.mxu0 0.0
        %875 = vmatpush.msra.mxu0 0.0
        %876 = vmatpush.msra.mxu0 0.0
        %877 = vmatpush.msra.mxu0 0.0
        %878 = vmatpush.msra.mxu0 0.0
        %879 = vmatpush.msra.mxu0 %v857
        %880 = vmatmul.f32.gmra.mxu0 %v862
        %v881 = vpop.f32.mrf.mxu0
        %v882 = vadd.f32 0.0, %v881
        %883 = vdwg.mxu0
        %v885 = vsel %vm599, %v803, 0
        %887 = vmatpush.msra.mxu0 0.0
        %888 = vmatpush.msra.mxu0 0.0
        %889 = vmatpush.msra.mxu0 0.0
        %890 = vmatpush.msra.mxu0 0.0
        %891 = vmatpush.msra.mxu0 0.0
        %892 = vmatpush.msra.mxu0 0.0
        %893 = vmatpush.msra.mxu0 0.0
        %894 = vmatpush.msra.mxu0 0.0
        %895 = vmatpush.msra.mxu0 0.0
        %896 = vmatpush.msra.mxu0 0.0
        %897 = vmatpush.msra.mxu0 0.0
        %898 = vmatpush.msra.mxu0 0.0
        %899 = vmatpush.msra.mxu0 0.0
        %900 = vmatpush.msra.mxu0 0.0
        %901 = vmatpush.msra.mxu0 0.0
        %902 = vmatpush.msra.mxu0 %v858
        %903 = vmatmul.f32.gmra.mxu0 %v885
        %v904 = vpop.f32.mrf.mxu0
        %v905 = vadd.f32 0.0, %v904
        %906 = vdwg.mxu0
        %v908 = vsel %vm599, %v829, 0
        %910 = vmatpush.msra.mxu0 0.0
        %911 = vmatpush.msra.mxu0 0.0
        %912 = vmatpush.msra.mxu0 0.0
        %913 = vmatpush.msra.mxu0 0.0
        %914 = vmatpush.msra.mxu0 0.0
        %915 = vmatpush.msra.mxu0 0.0
        %916 = vmatpush.msra.mxu0 0.0
        %917 = vmatpush.msra.mxu0 0.0
        %918 = vmatpush.msra.mxu0 0.0
        %919 = vmatpush.msra.mxu0 0.0
        %920 = vmatpush.msra.mxu0 0.0
        %921 = vmatpush.msra.mxu0 0.0
        %922 = vmatpush.msra.mxu0 0.0
        %923 = vmatpush.msra.mxu0 0.0
        %924 = vmatpush.msra.mxu0 0.0
        %925 = vmatpush.msra.mxu0 %v859
        %926 = vmatmul.f32.gmra.mxu0 %v908
        %v927 = vpop.f32.mrf.mxu0
        %v928 = vadd.f32 0.0, %v927
        %929 = vdwg.mxu0
        %v931 = vsel %vm599, %v855, 0
        %933 = vmatpush.msra.mxu0 0.0
        %934 = vmatpush.msra.mxu0 0.0
        %935 = vmatpush.msra.mxu0 0.0
        %936 = vmatpush.msra.mxu0 0.0
        %937 = vmatpush.msra.mxu0 0.0
        %938 = vmatpush.msra.mxu0 0.0
        %939 = vmatpush.msra.mxu0 0.0
        %940 = vmatpush.msra.mxu0 0.0
        %941 = vmatpush.msra.mxu0 0.0
        %942 = vmatpush.msra.mxu0 0.0
        %943 = vmatpush.msra.mxu0 0.0
        %944 = vmatpush.msra.mxu0 0.0
        %945 = vmatpush.msra.mxu0 0.0
        %946 = vmatpush.msra.mxu0 0.0
        %947 = vmatpush.msra.mxu0 0.0
        %948 = vmatpush.msra.mxu0 %v860
        %949 = vmatmul.f32.gmra.mxu0 %v931
        %v950 = vpop.f32.mrf.mxu0
        %v951 = vadd.f32 0.0, %v950
        %952 = vdwg.mxu0
        %v953 = vsel %vm439, %v882, 0.0
        %v954 = vsel %vm439, %v905, 0.0
        %v955 = vadd.f32 %v953, %v954
        %v956 = vsel %vm439, %v928, 0.0
        %v957 = vadd.f32 %v955, %v956
        %v958 = vsel %vm439, %v951, 0.0
        %v959 = vadd.f32 %v957, %v958
        %v960 = vld [vmem:[%s4] sm:$0x1]
        %v962 = vperm.slane %v960, 0
        %v964 = vadd.f32 %v959, %v962
        %v965 = vadd.f32 %v436, %v964
        %v966 = vld [vmem:[%s11] sm:$0x1]
        %v967 = vld [vmem:[%s12] sm:$0x1]
        %v968 = vsel %vm439, %v965, 0.0
        %969 = vadd.xlane.f32.xlu0 %v968
        %v970 = vpop.xlane.xlu0 %969
        %v971 = vmul.f32 %v970, %v449
        %v972 = vsub.f32 %v965, %v971
        %v973 = vmul.f32 %v972, %v972
        %v974 = vsel %vm439, %v973, 0.0
        %975 = vadd.xlane.f32.xlu0 %v974
        %v976 = vpop.xlane.xlu0 %975
        %v977 = vmul.f32 %v976, %v449
        %v978 = vadd.f32 %v977, 1e-05
        %v979 = vrsqrt.pop %v978
        %v980 = vmul.f32 %v979, %v978
        %v981 = vmul.f32 %v980, %v979
        %v982 = vmul.f32 0.5, %v981
        %v983 = vsub.f32 1.5, %v982
        %v984 = vmul.f32 %v979, %v983
        %vm985 = vweird.f32 %v978
        %vm986 = vweird.f32 %v979
        %vm987 = vmor %vm985, %vm986
        %v988 = vsel %vm987, %v979, %v984
        %v989 = vmul.f32 %v972, %v988
        %v991 = vperm.slane %v966, 0
        %v993 = vmul.f32 %v989, %v991
        %v995 = vperm.slane %v967, 0
        %v997 = vadd.f32 %v993, %v995
        %v998 = vld [vmem:[%s7] sm:$0xff]
        %v999 = vld [vmem:[%s7 + $0x8] sm:$0xff]
        %v1000 = vld [vmem:[%s7 + $0x10] sm:$0xff]
        %v1001 = vld [vmem:[%s7 + $0x18] sm:$0xff]
        %v1002 = vld [vmem:[%s8] sm:$0x1]
        %v1004 = vperm.slane %v1002, 0
        %v1007 = vsel %vm439, %v997, 0
        %1009 = vmatpush.msra.mxu0 0.0
        %1010 = vmatpush.msra.mxu0 0.0
        %1011 = vmatpush.msra.mxu0 0.0
        %1012 = vmatpush.msra.mxu0 0.0
        %1013 = vmatpush.msra.mxu0 0.0
        %1014 = vmatpush.msra.mxu0 0.0
        %1015 = vmatpush.msra.mxu0 0.0
        %1016 = vmatpush.msra.mxu0 0.0
        %1017 = vmatpush.msra.mxu0 0.0
        %1018 = vmatpush.msra.mxu0 0.0
        %1019 = vmatpush.msra.mxu0 0.0
        %1020 = vmatpush.msra.mxu0 0.0
        %1021 = vmatpush.msra.mxu0 %v1001
        %1022 = vmatpush.msra.mxu0 %v1000
        %1023 = vmatpush.msra.mxu0 %v999
        %1024 = vmatpush.msra.mxu0 %v998
        %1025 = vmatmul.f32.gmra.mxu0 %v1007
        %v1026 = vpop.f32.mrf.mxu0
        %v1027 = vadd.f32 %v1004, %v1026
        %1028 = vdwg.mxu0
        %v1029 = vmul.f32 %v1027, %v1027
        %v1030 = vmul.f32 %v1027, %v1029
        %v1031 = vmul.f32 %v1030, 0.044715
        %v1032 = vadd.f32 %v1027, %v1031
        %v1033 = vmul.f32 %v1032, 0.7978846
        %v1034 = vtanh.pop %v1033
        %v1035 = vadd.f32 %v1034, 1.0
        %v1036 = vmul.f32 %v1035, 0.5
        %v1037 = vmul.f32 %v1027, %v1036
        %v1038 = vld [vmem:[%s9] sm:$0xff]
        %v1039 = vld [vmem:[%s9 + $0x8] sm:$0xff]
        %v1040 = vld [vmem:[%s9 + $0x10] sm:$0xff]
        %v1041 = vld [vmem:[%s9 + $0x18] sm:$0xff]
        %v1042 = vld [vmem:[%s9 + $0x20] sm:$0xff]
        %v1043 = vld [vmem:[%s9 + $0x28] sm:$0xff]
        %v1044 = vld [vmem:[%s9 + $0x30] sm:$0xff]
        %v1045 = vld [vmem:[%s9 + $0x38] sm:$0xff]
        %v1046 = vld [vmem:[%s10] sm:$0x1]
        %v1048 = vperm.slane %v1046, 0
        %vm1050 = vcmask 523264
        %v1052 = vsel %vm1050, %v1037, 0
        %1054 = vmatpush.msra.mxu0 0.0
        %1055 = vmatpush.msra.mxu0 0.0
        %1056 = vmatpush.msra.mxu0 0.0
        %1057 = vmatpush.msra.mxu0 0.0
        %1058 = vmatpush.msra.mxu0 0.0
        %1059 = vmatpush.msra.mxu0 0.0
        %1060 = vmatpush.msra.mxu0 0.0
        %1061 = vmatpush.msra.mxu0 0.0
        %1062 = vmatpush.msra.mxu0 %v1045
        %1063 = vmatpush.msra.mxu0 %v1044
        %1064 = vmatpush.msra.mxu0 %v1043
        %1065 = vmatpush.msra.mxu0 %v1042
        %1066 = vmatpush.msra.mxu0 %v1041
        %1067 = vmatpush.msra.mxu0 %v1040
        %1068 = vmatpush.msra.mxu0 %v1039
        %1069 = vmatpush.msra.mxu0 %v1038
        %1070 = vmatmul.f32.gmra.mxu0 %v1052
        %v1071 = vpop.f32.mrf.mxu0
        %v1072 = vadd.f32 %v1048, %v1071
        %1073 = vdwg.mxu0
        %v1074 = vadd.f32 %v965, %v1072
        %1075 = vst.msk [vmem:[%s431] sm:$0xff] %vm439, %v1074
        %s1076 = sand.u32 %s313, 1
        %s1077 = scalar_lea.sflag [#allocation3], %s1076
        %s1078 = sand.u32 %s313, 1
        %s1079 = smul.addr %s1078, 8
        %s1080 = scalar_lea.vmem [#allocation2], %s1079
        // Predicated region
        $region73: #{tpu_custom_call.1} parent=71 // pred_check
          %p1081 = pneg %p323
        $region74: #{tpu_custom_call.1} parent=71 // pred_check_branch
          %1083 = sbr.rel (%p1081) target = $region76
        $region75: #{tpu_custom_call.1} parent=71 // pred_region
          %1085 = vsyncadd %s1077, 0
          %s1086 = smul.addr %s27, 8
          %s1087 = scalar_lea.hbm %s13, %s1086
          %s1089 = sshll.u32 %s1080, 4
          %s1090 = int_to_ptr.vmem [resolvable:$true] %s1089
          %s1091 = sshll.u32 %s1087, 4
          %s1092 = int_to_ptr.hbm [resolvable:$true] %s1091
          %1094 = dma.vmem_to_hbm [thread:$0]  %s1090, 128, %s1092, %s1077
        $region76: #{tpu_custom_call.1} parent=71 // pred_fallthru
          _
      $region72: #{tpu_custom_call.1} parent=5 // pred_fallthru
        _
      %p1095 = scmp.le.s32.totalorder 2, %s22
      // Predicated region
      $region77: #{tpu_custom_call.1} parent=5 // pred_check
        %p1096 = pneg %p1095
      $region78: #{tpu_custom_call.1} parent=5 // pred_check_branch
        %1098 = sbr.rel (%p1096) target = $region80
      $region79: #{tpu_custom_call.1} parent=5 // pred_region
        %s1099 = ssub.s32 %s22, 2
        // Predicated region
        $region81: #{tpu_custom_call.1} parent=79 // pred_check
          %p1100 = pneg %p329
        $region82: #{tpu_custom_call.1} parent=79 // pred_check_branch
          %1102 = sbr.rel (%p1100) target = $region84
        $region83: #{tpu_custom_call.1} parent=79 // pred_region
          %s1103 = sand.u32 %s314, 1
          %s1104 = scalar_lea.sflag [#allocation3], %s1103
          %s1105 = sand.u32 %s314, 1
          %s1106 = smul.addr %s1105, 8
          %s1107 = scalar_lea.vmem [#allocation2], %s1106
          %1109 = dma.done %s1104, 128
        $region84: #{tpu_custom_call.1} parent=79 // pred_fallthru
          _
      $region80: #{tpu_custom_call.1} parent=5 // pred_fallthru
        _
    $region6: #{tpu_custom_call.1} parent=1 // loop_footer
      %s26 = sadd.s32 1, %s22
    $region7: #{tpu_custom_call.1} parent=1 // loop_footer_branch
      %21 = sbr.rel target = $region3
    $region8: #{tpu_custom_call.1} parent=1 // loop_exit
      _
    %1110 = vsyncpa [#allocation3], 1
    %s1111 = scalar_lea.sflag [#allocation3], 1
    %1112 = vsyncpa %s1111, 1

</llo_original>
